<compile_context>
chip_gen: v6e
topology: v6e:2x2x1
jax: 0.10.0
libtpu: 0.0.40
codegen_flags: <defaults>
</compile_context>

<pallas_src>
import math
from functools import partial

import jax
import jax.numpy as jnp
from jax import lax
from jax.experimental import pallas as pl
from jax.experimental.pallas import tpu as pltpu


def _pick_depth_tile(D, hw):
    """Smallest depth tile whose flattened width is lane-aligned and >= 512."""
    divisors = [d for d in range(1, D + 1) if D % d == 0]
    for d in divisors:
        if (d * hw) % 128 == 0 and d * hw >= 512:
            return d
    for d in divisors:
        if (d * hw) % 128 == 0:
            return d
    return D      # fall back to one tile == whole volume (block == full dims)


def _make_kernel(C, Cc, tile_s, pad, shifts, lane_align):
    K1 = 27 * C + Cc + 1          # conv taps + cond channels + bias-ones row
    inv_sqrt2 = 1.0 / math.sqrt(2.0)

    def kernel(x_ref, diff_ref, cond_ref, mask_ref, wf_ref, wo_ref, bo_ref,
               res_ref, skip_ref, ybuf, col):
        t = pl.program_id(1)
        base = t * tile_s
        if lane_align > 1:
            base = pl.multiple_of(base, lane_align)

        diff = diff_ref[0]                                         # (C, 1)

        # Halo'd, diffusion-shifted activations for this spatial tile.
        # x_ref holds the whole padded sample (pad filled with -diff by the
        # wrapper), so "+ diff" makes the depth zero-padding exact.
        ybuf[...] = x_ref[0, :, pl.ds(base, tile_s + 2 * pad)] + diff

        # --- im2col: 27 dilated taps, one H/W mask live at a time ----------
        for ky in range(3):
            for kx in range(3):
                hw_idx = ky * 3 + kx
                if hw_idx == 4:                       # center tap: always valid
                    for kz in range(3):
                        tap = kz * 9 + hw_idx
                        s0 = pad + shifts[tap]
                        col[tap * C:(tap + 1) * C, :] = (
                            ybuf[:, s0:s0 + tile_s].astype(jnp.bfloat16))
                else:
                    valid = mask_ref[hw_idx:hw_idx + 1, :] != 0.0   # (1, tileS)
                    for kz in range(3):
                        tap = kz * 9 + hw_idx
                        s0 = pad + shifts[tap]
                        sl = ybuf[:, s0:s0 + tile_s]
                        col[tap * C:(tap + 1) * C, :] = (
                            jnp.where(valid, sl, 0.0).astype(jnp.bfloat16))

        # conditions channels + constant-ones bias row appended to the im2col
        col[27 * C:27 * C + Cc, :] = cond_ref[0].astype(jnp.bfloat16)
        col[27 * C + Cc:K1, :] = jnp.ones((1, tile_s), jnp.bfloat16)

        # --- dilated bidir conv + conditions proj + bias: ONE bf16 matmul ---
        y = jnp.dot(wf_ref[...], col[...],
                    preferred_element_type=jnp.float32)             # (2C, tileS)

        # gated activation in f32
        g = jax.nn.sigmoid(y[:C, :]) * jnp.tanh(y[C:, :])           # (C, tileS)

        # output projection (residual & skip fused); tiny K=C matmul kept f32
        o = jnp.dot(wo_ref[...], g,
                    preferred_element_type=jnp.float32) + bo_ref[...]

        x_tile = ybuf[:, pad:pad + tile_s] - diff                   # recover x
        res_ref[0] = ((x_tile + o[:C, :]) * inv_sqrt2).astype(res_ref.dtype)
        skip_ref[0] = o[C:, :].astype(skip_ref.dtype)

    return kernel


@partial(jax.jit, static_argnums=(4,))
def diffwave3d_block(kparams, x, diffusion_step, embedded_conditions, dilation):
    """x: (N,C,D,H,W); diffusion_step: (N,Dd); embedded_conditions: (N,Cc,D,H,W)."""
    N, C, D, H, W = x.shape
    Cc = embedded_conditions.shape[1]
    dz, dy, dx = dilation
    hw = H * W
    S = D * hw

    TD = _pick_depth_tile(D, hw)
    tile_s = TD * hw
    n_tiles = D // TD
    pad_raw = dz * hw + dy * W + dx               # max |flattened tap shift|
    pad = -(-pad_raw // 128) * 128                # lane-align the halo
    K1 = 27 * C + Cc + 1

    # Diffusion Linear hoisted out of the kernel (an M=1 matmul per grid step
    # is pure MXU fill/drain overhead inside the kernel).
    diff = (diffusion_step @ kparams['wd'].T + kparams['bd'])[:, :, None]   # (N,C,1)

    # Native NCDHW flatten (free).  Pad the flat spatial axis with -diff so
    # the in-kernel "+ diff" yields exact zeros in the depth padding.
    x_flat = x.reshape(N, C, S)
    halo = jnp.broadcast_to(-diff, (N, C, pad))
    x_pad = jnp.concatenate([halo, x_flat, halo], axis=2)          # (N,C,S+2*pad)
    cond_flat = embedded_conditions.reshape(N, Cc, S)

    # H/W validity masks are grid-invariant (period H*W) -> hoisted here.
    pos = jnp.arange(tile_s, dtype=jnp.int32)
    hh = (pos // W) % H
    ww = pos % W
    rows = []
    for ky in range(3):
        for kx in range(3):
            oh = (ky - 1) * dy
            ow = (kx - 1) * dx
            rows.append((hh + oh >= 0) & (hh + oh < H) &
                        (ww + ow >= 0) & (ww + ow < W))
    hw_mask = jnp.stack(rows).astype(jnp.float32)                  # (9, tileS)

    shifts = tuple((kz - 1) * dz * hw + (ky - 1) * dy * W + (kx - 1) * dx
                   for kz in range(3) for ky in range(3) for kx in range(3))
    lane_align = math.gcd(tile_s, 128)

    kernel = _make_kernel(C, Cc, tile_s, pad, shifts, lane_align)

    # VMEM budget (explicit, with headroom) and advisory cost estimate.
    vmem_bytes = int(
        2 * C * (S + 2 * pad) * 4                 # resident padded sample
        + 2 * Cc * tile_s * 4                     # cond tile (double buffered)
        + 2 * 9 * tile_s * 4                      # masks
        + 2 * C * K1 * 2 + 2 * C * C * 4 + 2 * C * 4 + C * 4
        + 2 * 2 * 2 * C * tile_s * 4              # res+skip tiles (double buffered)
        + C * (tile_s + 2 * pad) * 4              # ybuf scratch
        + K1 * tile_s * 2)                        # bf16 im2col scratch
    vmem_limit = min(max(int(vmem_bytes * 1.5), 32 * 1024 * 1024), 100 * 1024 * 1024)

    cost = pl.CostEstimate(
        flops=int(N * S * (2 * 2 * C * K1 + 2 * 2 * C * C)),
        transcendentals=int(2 * N * C * S),
        bytes_accessed=int(4 * N * (C * (S + 2 * pad) + Cc * S + 4 * C * S)
                           + 2 * 2 * C * K1))

    # TODO(synk): for volumes where C*(S+2*pad) no longer fits VMEM, replace the
    # resident x_pad block with a manual halo'd depth-slab DMA (memory_space=pl.ANY
    # + double buffering); and at production C (>=64) consider stacking two batch
    # samples per tile along the lane axis to fill the 256-wide MXU.
    res_flat, skip_flat = pl.pallas_call(
        kernel,
        out_shape=(jax.ShapeDtypeStruct((N, C, S), jnp.float32),
                   jax.ShapeDtypeStruct((N, C, S), jnp.float32)),
        grid_spec=pltpu.PrefetchScalarGridSpec(
            num_scalar_prefetch=0,
            grid=(N, n_tiles),
            in_specs=[
                pl.BlockSpec((1, C, S + 2 * pad), lambda n, t: (n, 0, 0)),  # padded x
                pl.BlockSpec((1, C, 1), lambda n, t: (n, 0, 0)),            # diff add
                pl.BlockSpec((1, Cc, tile_s), lambda n, t: (n, 0, t)),      # cond tile
                pl.BlockSpec((9, tile_s), lambda n, t: (0, 0)),             # H/W masks
                pl.BlockSpec((2 * C, K1), lambda n, t: (0, 0)),             # fused W (bf16)
                pl.BlockSpec((2 * C, C), lambda n, t: (0, 0)),              # out-proj W
                pl.BlockSpec((2 * C, 1), lambda n, t: (0, 0)),              # out-proj b
            ],
            out_specs=[
                pl.BlockSpec((1, C, tile_s), lambda n, t: (n, 0, t)),
                pl.BlockSpec((1, C, tile_s), lambda n, t: (n, 0, t)),
            ],
            scratch_shapes=[
                pltpu.VMEM((C, tile_s + 2 * pad), jnp.float32),   # halo'd activations
                pltpu.VMEM((K1, tile_s), jnp.bfloat16),           # im2col (+cond+ones)
            ]),
        compiler_params=pltpu.CompilerParams(
            dimension_semantics=("parallel", "parallel"),
            vmem_limit_bytes=vmem_limit),
        cost_estimate=cost,
    )(x_pad, diff, cond_flat, hw_mask,
      kparams['w_fused'], kparams['wo'], kparams['bo'])

    return (res_flat.reshape(N, C, D, H, W),
            skip_flat.reshape(N, C, D, H, W))


def init_params(key, C, diffusion_dim, cond_dims):
    """Deterministic synthetic init matching the PyTorch module's initializers."""
    C2 = 2 * C
    ks = jax.random.split(key, 10)

    def kaiming(k, shape):
        fan_in = shape[1] * math.prod(shape[2:])
        return (jax.random.normal(k, shape) * math.sqrt(2.0 / fan_in)).astype(jnp.float32)

    def bias(k, n, fan_in):
        bound = 1.0 / math.sqrt(fan_in)
        return jax.random.uniform(k, (n,), minval=-bound, maxval=bound).astype(jnp.float32)

    wf = kaiming(ks[0], (C2, C, 3, 3, 3)); bf = bias(ks[1], C2, C * 27)
    wr = kaiming(ks[2], (C2, C, 3, 3, 3)); br = bias(ks[3], C2, C * 27)
    wd = (jax.random.normal(ks[4], (C, diffusion_dim)) /
          math.sqrt(diffusion_dim)).astype(jnp.float32)
    bd = bias(ks[5], C, diffusion_dim)
    wc = kaiming(ks[6], (C2, cond_dims, 1, 1, 1)); bc = bias(ks[7], C2, cond_dims)
    wo = kaiming(ks[8], (C2, C, 1, 1, 1)); bo = bias(ks[9], C2, C)
    return dict(wf=wf, bf=bf, wr=wr, br=br, wd=wd, bd=bd, wc=wc, bc=bc, wo=wo, bo=bo)


def pack_params(raw):
    """Repack params for the kernel layout (bf16 fused weight, bias folded)."""
    wf, wr = raw['wf'], raw['wr']
    C2, C = wf.shape[0], wf.shape[1]
    # bidirectional conv == one cross-correlation with (wf + depth-flipped wr);
    # exact only because depth padding == dilation (symmetric) in this module.
    w_eff = wf + wr[:, :, ::-1, :, :]                                  # (2C,C,3,3,3)
    w_conv = jnp.transpose(w_eff, (0, 2, 3, 4, 1)).reshape(C2, 27 * C)
    w_cond = raw['wc'][:, :, 0, 0, 0]                                  # (2C,Cc)
    b_fused = (raw['bf'] + raw['br'] + raw['bc']).reshape(C2, 1)
    w_fused = jnp.concatenate([w_conv, w_cond, b_fused],
                              axis=1).astype(jnp.bfloat16)             # (2C, 27C+Cc+1)
    return dict(wd=raw['wd'], bd=raw['bd'], w_fused=w_fused,
                wo=raw['wo'][:, :, 0, 0, 0], bo=raw['bo'].reshape(C2, 1))


def reference_forward(raw, x, diffusion_step, cond, dilation):
    """Pure-JAX (f32) mirror of the PyTorch DiffWave3DResidualBlock.forward."""
    C = x.shape[1]

    def conv3d(xx, w, b, padding, dil):
        out = lax.conv_general_dilated(
            xx, w, window_strides=(1, 1, 1),
            padding=[(p, p) for p in padding],
            rhs_dilation=dil,
            dimension_numbers=('NCDHW', 'OIDHW', 'NCDHW'))
        return out + b[None, :, None, None, None]

    diff = diffusion_step @ raw['wd'].T + raw['bd']
    y = x + diff[:, :, None, None, None]
    conditions = conv3d(cond, raw['wc'], raw['bc'], (0, 0, 0), (1, 1, 1))
    fwd = conv3d(y, raw['wf'], raw['bf'], dilation, dilation)
    rev = conv3d(y[:, :, ::-1], raw['wr'], raw['br'], dilation, dilation)[:, :, ::-1]
    y = fwd + rev + conditions
    gate, filt = y[:, :C], y[:, C:]
    y = jax.nn.sigmoid(gate) * jnp.tanh(filt)
    y = conv3d(y, raw['wo'], raw['bo'], (0, 0, 0), (1, 1, 1))
    residual, skip = y[:, :C], y[:, C:]
    return (x + residual) / math.sqrt(2.0), skip


if __name__ == "__main__":
    residual_channels = 8          # C
    dilation = (2, 1, 1)
    diffusion_dim = 16
    cond_dims = 6
    N, D, H, W = 2, 8, 8, 16       # H*W = 128 -> lane-aligned tiles, 2 depth tiles

    key = jax.random.PRNGKey(0)
    k1, k2, k3, kp = jax.random.split(key, 4)
    x = jax.random.normal(k1, (N, residual_channels, D, H, W), jnp.float32)
    diffusion_step = jax.random.normal(k2, (N, diffusion_dim), jnp.float32)
    embedded_conditions = jax.random.normal(k3, (N, cond_dims, D, H, W), jnp.float32)

    raw = init_params(kp, residual_channels, diffusion_dim, cond_dims)
    kparams = pack_params(raw)

    res, skip = diffwave3d_block(kparams, x, diffusion_step, embedded_conditions, dilation)
    jax.block_until_ready((res, skip))

    res_ref, skip_ref = reference_forward(raw, x, diffusion_step,
                                          embedded_conditions, dilation)
    err_r = float(jnp.max(jnp.abs(res - res_ref)))
    err_s = float(jnp.max(jnp.abs(skip - skip_ref)))
    # bf16 matmul operands (f32 accumulation) => a few 1e-3 absolute error expected
    assert err_r < 5e-2 and err_s < 5e-2, \
        f"mismatch: residual max err {err_r:.4g}, skip max err {err_s:.4g}"
    print("KERNEL_OK")
</pallas_src>

<mosaic_0001>
module attributes {stable_mosaic.version = 11 : i64} {
  func.func @kernel(%arg0: i32, %arg1: i32, %arg2: memref<1x8x1792xf32, #tpu.memory_space<vmem>>, %arg3: memref<1x8x1xf32, #tpu.memory_space<vmem>>, %arg4: memref<1x6x512xf32, #tpu.memory_space<vmem>>, %arg5: memref<9x512xf32, #tpu.memory_space<vmem>>, %arg6: memref<16x223xbf16, #tpu.memory_space<vmem>>, %arg7: memref<16x8xf32, #tpu.memory_space<vmem>>, %arg8: memref<16x1xf32, #tpu.memory_space<vmem>>, %arg9: memref<1x8x512xf32, #tpu.memory_space<vmem>>, %arg10: memref<1x8x512xf32, #tpu.memory_space<vmem>>, %arg11: memref<8x1280xf32, #tpu.memory_space<vmem>>, %arg12: memref<223x512xbf16, #tpu.memory_space<vmem>>) attributes {dimension_semantics = [#tpu.dimension_semantics<parallel>, #tpu.dimension_semantics<parallel>], iteration_bounds = array<i64: 2, 2>, scalar_prefetch = 0 : i64, scratch_operands = 2 : i64, tpu.core_type = #tpu.core_type<tc>, window_params = [{transform_indices = @transform_0, window_bounds = array<i64: 1, 8, 1792>}, {transform_indices = @transform_1, window_bounds = array<i64: 1, 8, 1>}, {transform_indices = @transform_2, window_bounds = array<i64: 1, 6, 512>}, {pipeline_mode = #tpu.pipeline_mode<synchronous>, transform_indices = @transform_3, window_bounds = array<i64: 9, 512>}, {pipeline_mode = #tpu.pipeline_mode<synchronous>, transform_indices = @transform_4, window_bounds = array<i64: 16, 223>}, {pipeline_mode = #tpu.pipeline_mode<synchronous>, transform_indices = @transform_5, window_bounds = array<i64: 16, 8>}, {pipeline_mode = #tpu.pipeline_mode<synchronous>, transform_indices = @transform_6, window_bounds = array<i64: 16, 1>}, {transform_indices = @transform_7, window_bounds = array<i64: 1, 8, 512>}, {transform_indices = @transform_8, window_bounds = array<i64: 1, 8, 512>}]} {
    %c512_i32 = arith.constant 512 : i32
    %0 = arith.muli %arg1, %c512_i32 : i32
    %1 = tpu.assume_multiple %0, 128 : i32
    %c0 = arith.constant 0 : index
    %c0_0 = arith.constant 0 : index
    %c0_1 = arith.constant 0 : index
    %2 = vector.load %arg3[%c0, %c0_0, %c0_1] : memref<1x8x1xf32, #tpu.memory_space<vmem>>, vector<1x8x1xf32>
    %3 = vector.shape_cast %2 : vector<1x8x1xf32> to vector<8x1xf32>
    %c0_2 = arith.constant 0 : index
    %c0_3 = arith.constant 0 : index
    %4 = arith.index_cast %1 : i32 to index
    %5 = vector.load %arg2[%c0_2, %c0_3, %4] : memref<1x8x1792xf32, #tpu.memory_space<vmem>>, vector<1x8x1280xf32>
    %6 = vector.shape_cast %5 : vector<1x8x1280xf32> to vector<8x1280xf32>
    %7 = vector.broadcast %3 : vector<8x1xf32> to vector<8x1280xf32>
    %8 = arith.addf %6, %7 : vector<8x1280xf32>
    %c0_4 = arith.constant 0 : index
    %c0_5 = arith.constant 0 : index
    %9 = vector.load %arg11[%c0_4, %c0_5] : memref<8x1280xf32, #tpu.memory_space<vmem>>, vector<8x1280xf32>
    tpu.vector_store %arg11[%c0_4, %c0_5], %8 {strides = array<i32>} : memref<8x1280xf32, #tpu.memory_space<vmem>>, vector<8x1280xf32>,
    %c0_6 = arith.constant 0 : index
    %c0_7 = arith.constant 0 : index
    %10 = vector.load %arg5[%c0_6, %c0_7] : memref<9x512xf32, #tpu.memory_space<vmem>>, vector<1x512xf32>
    %cst = arith.constant 0.000000e+00 : f32
    %11 = vector.broadcast %cst : f32 to vector<1x512xf32>
    %12 = arith.cmpf one, %10, %11 : vector<1x512xf32>
    %c0_8 = arith.constant 0 : index
    %c111 = arith.constant 111 : index
    %13 = vector.load %arg11[%c0_8, %c111] : memref<8x1280xf32, #tpu.memory_space<vmem>>, vector<8x512xf32>
    %cst_9 = arith.constant 0.000000e+00 : f32
    %14 = vector.shape_cast %12 : vector<1x512xi1> to vector<1x512xi1>
    %15 = vector.broadcast %14 : vector<1x512xi1> to vector<8x512xi1>
    %16 = vector.broadcast %cst_9 : f32 to vector<8x512xf32>
    %17 = arith.select %15, %13, %16 : vector<8x512xi1>, vector<8x512xf32>
    %18 = arith.truncf %17 : vector<8x512xf32> to vector<8x512xbf16>
    %c0_10 = arith.constant 0 : index
    %c0_11 = arith.constant 0 : index
    %19 = vector.load %arg12[%c0_10, %c0_11] : memref<223x512xbf16, #tpu.memory_space<vmem>>, vector<8x512xbf16>
    tpu.vector_store %arg12[%c0_10, %c0_11], %18 {strides = array<i32>} : memref<223x512xbf16, #tpu.memory_space<vmem>>, vector<8x512xbf16>,
    %c0_12 = arith.constant 0 : index
    %c367 = arith.constant 367 : index
    %20 = vector.load %arg11[%c0_12, %c367] : memref<8x1280xf32, #tpu.memory_space<vmem>>, vector<8x512xf32>
    %cst_13 = arith.constant 0.000000e+00 : f32
    %21 = vector.shape_cast %12 : vector<1x512xi1> to vector<1x512xi1>
    %22 = vector.broadcast %21 : vector<1x512xi1> to vector<8x512xi1>
    %23 = vector.broadcast %cst_13 : f32 to vector<8x512xf32>
    %24 = arith.select %22, %20, %23 : vector<8x512xi1>, vector<8x512xf32>
    %25 = arith.truncf %24 : vector<8x512xf32> to vector<8x512xbf16>
    %c72 = arith.constant 72 : index
    %c0_14 = arith.constant 0 : index
    %26 = vector.load %arg12[%c72, %c0_14] : memref<223x512xbf16, #tpu.memory_space<vmem>>, vector<8x512xbf16>
    tpu.vector_store %arg12[%c72, %c0_14], %25 {strides = array<i32>} : memref<223x512xbf16, #tpu.memory_space<vmem>>, vector<8x512xbf16>,
    %c0_15 = arith.constant 0 : index
    %c623 = arith.constant 623 : index
    %27 = vector.load %arg11[%c0_15, %c623] : memref<8x1280xf32, #tpu.memory_space<vmem>>, vector<8x512xf32>
    %cst_16 = arith.constant 0.000000e+00 : f32
    %28 = vector.shape_cast %12 : vector<1x512xi1> to vector<1x512xi1>
    %29 = vector.broadcast %28 : vector<1x512xi1> to vector<8x512xi1>
    %30 = vector.broadcast %cst_16 : f32 to vector<8x512xf32>
    %31 = arith.select %29, %27, %30 : vector<8x512xi1>, vector<8x512xf32>
    %32 = arith.truncf %31 : vector<8x512xf32> to vector<8x512xbf16>
    %c144 = arith.constant 144 : index
    %c0_17 = arith.constant 0 : index
    %33 = vector.load %arg12[%c144, %c0_17] : memref<223x512xbf16, #tpu.memory_space<vmem>>, vector<8x512xbf16>
    tpu.vector_store %arg12[%c144, %c0_17], %32 {strides = array<i32>} : memref<223x512xbf16, #tpu.memory_space<vmem>>, vector<8x512xbf16>,
    %c1 = arith.constant 1 : index
    %c0_18 = arith.constant 0 : index
    %34 = vector.load %arg5[%c1, %c0_18] : memref<9x512xf32, #tpu.memory_space<vmem>>, vector<1x512xf32>
    %cst_19 = arith.constant 0.000000e+00 : f32
    %35 = vector.broadcast %cst_19 : f32 to vector<1x512xf32>
    %36 = arith.cmpf one, %34, %35 : vector<1x512xf32>
    %c0_20 = arith.constant 0 : index
    %c112 = arith.constant 112 : index
    %37 = vector.load %arg11[%c0_20, %c112] : memref<8x1280xf32, #tpu.memory_space<vmem>>, vector<8x512xf32>
    %cst_21 = arith.constant 0.000000e+00 : f32
    %38 = vector.shape_cast %36 : vector<1x512xi1> to vector<1x512xi1>
    %39 = vector.broadcast %38 : vector<1x512xi1> to vector<8x512xi1>
    %40 = vector.broadcast %cst_21 : f32 to vector<8x512xf32>
    %41 = arith.select %39, %37, %40 : vector<8x512xi1>, vector<8x512xf32>
    %42 = arith.truncf %41 : vector<8x512xf32> to vector<8x512xbf16>
    %c8 = arith.constant 8 : index
    %c0_22 = arith.constant 0 : index
    %43 = vector.load %arg12[%c8, %c0_22] : memref<223x512xbf16, #tpu.memory_space<vmem>>, vector<8x512xbf16>
    tpu.vector_store %arg12[%c8, %c0_22], %42 {strides = array<i32>} : memref<223x512xbf16, #tpu.memory_space<vmem>>, vector<8x512xbf16>,
    %c0_23 = arith.constant 0 : index
    %c368 = arith.constant 368 : index
    %44 = vector.load %arg11[%c0_23, %c368] : memref<8x1280xf32, #tpu.memory_space<vmem>>, vector<8x512xf32>
    %cst_24 = arith.constant 0.000000e+00 : f32
    %45 = vector.shape_cast %36 : vector<1x512xi1> to vector<1x512xi1>
    %46 = vector.broadcast %45 : vector<1x512xi1> to vector<8x512xi1>
    %47 = vector.broadcast %cst_24 : f32 to vector<8x512xf32>
    %48 = arith.select %46, %44, %47 : vector<8x512xi1>, vector<8x512xf32>
    %49 = arith.truncf %48 : vector<8x512xf32> to vector<8x512xbf16>
    %c80 = arith.constant 80 : index
    %c0_25 = arith.constant 0 : index
    %50 = vector.load %arg12[%c80, %c0_25] : memref<223x512xbf16, #tpu.memory_space<vmem>>, vector<8x512xbf16>
    tpu.vector_store %arg12[%c80, %c0_25], %49 {strides = array<i32>} : memref<223x512xbf16, #tpu.memory_space<vmem>>, vector<8x512xbf16>,
    %c0_26 = arith.constant 0 : index
    %c624 = arith.constant 624 : index
    %51 = vector.load %arg11[%c0_26, %c624] : memref<8x1280xf32, #tpu.memory_space<vmem>>, vector<8x512xf32>
    %cst_27 = arith.constant 0.000000e+00 : f32
    %52 = vector.shape_cast %36 : vector<1x512xi1> to vector<1x512xi1>
    %53 = vector.broadcast %52 : vector<1x512xi1> to vector<8x512xi1>
    %54 = vector.broadcast %cst_27 : f32 to vector<8x512xf32>
    %55 = arith.select %53, %51, %54 : vector<8x512xi1>, vector<8x512xf32>
    %56 = arith.truncf %55 : vector<8x512xf32> to vector<8x512xbf16>
    %c152 = arith.constant 152 : index
    %c0_28 = arith.constant 0 : index
    %57 = vector.load %arg12[%c152, %c0_28] : memref<223x512xbf16, #tpu.memory_space<vmem>>, vector<8x512xbf16>
    tpu.vector_store %arg12[%c152, %c0_28], %56 {strides = array<i32>} : memref<223x512xbf16, #tpu.memory_space<vmem>>, vector<8x512xbf16>,
    %c2 = arith.constant 2 : index
    %c0_29 = arith.constant 0 : index
    %58 = vector.load %arg5[%c2, %c0_29] : memref<9x512xf32, #tpu.memory_space<vmem>>, vector<1x512xf32>
    %cst_30 = arith.constant 0.000000e+00 : f32
    %59 = vector.broadcast %cst_30 : f32 to vector<1x512xf32>
    %60 = arith.cmpf one, %58, %59 : vector<1x512xf32>
    %c0_31 = arith.constant 0 : index
    %c113 = arith.constant 113 : index
    %61 = vector.load %arg11[%c0_31, %c113] : memref<8x1280xf32, #tpu.memory_space<vmem>>, vector<8x512xf32>
    %cst_32 = arith.constant 0.000000e+00 : f32
    %62 = vector.shape_cast %60 : vector<1x512xi1> to vector<1x512xi1>
    %63 = vector.broadcast %62 : vector<1x512xi1> to vector<8x512xi1>
    %64 = vector.broadcast %cst_32 : f32 to vector<8x512xf32>
    %65 = arith.select %63, %61, %64 : vector<8x512xi1>, vector<8x512xf32>
    %66 = arith.truncf %65 : vector<8x512xf32> to vector<8x512xbf16>
    %c16 = arith.constant 16 : index
    %c0_33 = arith.constant 0 : index
    %67 = vector.load %arg12[%c16, %c0_33] : memref<223x512xbf16, #tpu.memory_space<vmem>>, vector<8x512xbf16>
    tpu.vector_store %arg12[%c16, %c0_33], %66 {strides = array<i32>} : memref<223x512xbf16, #tpu.memory_space<vmem>>, vector<8x512xbf16>,
    %c0_34 = arith.constant 0 : index
    %c369 = arith.constant 369 : index
    %68 = vector.load %arg11[%c0_34, %c369] : memref<8x1280xf32, #tpu.memory_space<vmem>>, vector<8x512xf32>
    %cst_35 = arith.constant 0.000000e+00 : f32
    %69 = vector.shape_cast %60 : vector<1x512xi1> to vector<1x512xi1>
    %70 = vector.broadcast %69 : vector<1x512xi1> to vector<8x512xi1>
    %71 = vector.broadcast %cst_35 : f32 to vector<8x512xf32>
    %72 = arith.select %70, %68, %71 : vector<8x512xi1>, vector<8x512xf32>
    %73 = arith.truncf %72 : vector<8x512xf32> to vector<8x512xbf16>
    %c88 = arith.constant 88 : index
    %c0_36 = arith.constant 0 : index
    %74 = vector.load %arg12[%c88, %c0_36] : memref<223x512xbf16, #tpu.memory_space<vmem>>, vector<8x512xbf16>
    tpu.vector_store %arg12[%c88, %c0_36], %73 {strides = array<i32>} : memref<223x512xbf16, #tpu.memory_space<vmem>>, vector<8x512xbf16>,
    %c0_37 = arith.constant 0 : index
    %c625 = arith.constant 625 : index
    %75 = vector.load %arg11[%c0_37, %c625] : memref<8x1280xf32, #tpu.memory_space<vmem>>, vector<8x512xf32>
    %cst_38 = arith.constant 0.000000e+00 : f32
    %76 = vector.shape_cast %60 : vector<1x512xi1> to vector<1x512xi1>
    %77 = vector.broadcast %76 : vector<1x512xi1> to vector<8x512xi1>
    %78 = vector.broadcast %cst_38 : f32 to vector<8x512xf32>
    %79 = arith.select %77, %75, %78 : vector<8x512xi1>, vector<8x512xf32>
    %80 = arith.truncf %79 : vector<8x512xf32> to vector<8x512xbf16>
    %c160 = arith.constant 160 : index
    %c0_39 = arith.constant 0 : index
    %81 = vector.load %arg12[%c160, %c0_39] : memref<223x512xbf16, #tpu.memory_space<vmem>>, vector<8x512xbf16>
    tpu.vector_store %arg12[%c160, %c0_39], %80 {strides = array<i32>} : memref<223x512xbf16, #tpu.memory_space<vmem>>, vector<8x512xbf16>,
    %c3 = arith.constant 3 : index
    %c0_40 = arith.constant 0 : index
    %82 = vector.load %arg5[%c3, %c0_40] : memref<9x512xf32, #tpu.memory_space<vmem>>, vector<1x512xf32>
    %cst_41 = arith.constant 0.000000e+00 : f32
    %83 = vector.broadcast %cst_41 : f32 to vector<1x512xf32>
    %84 = arith.cmpf one, %82, %83 : vector<1x512xf32>
    %c0_42 = arith.constant 0 : index
    %c127 = arith.constant 127 : index
    %85 = vector.load %arg11[%c0_42, %c127] : memref<8x1280xf32, #tpu.memory_space<vmem>>, vector<8x512xf32>
    %cst_43 = arith.constant 0.000000e+00 : f32
    %86 = vector.shape_cast %84 : vector<1x512xi1> to vector<1x512xi1>
    %87 = vector.broadcast %86 : vector<1x512xi1> to vector<8x512xi1>
    %88 = vector.broadcast %cst_43 : f32 to vector<8x512xf32>
    %89 = arith.select %87, %85, %88 : vector<8x512xi1>, vector<8x512xf32>
    %90 = arith.truncf %89 : vector<8x512xf32> to vector<8x512xbf16>
    %c24 = arith.constant 24 : index
    %c0_44 = arith.constant 0 : index
    %91 = vector.load %arg12[%c24, %c0_44] : memref<223x512xbf16, #tpu.memory_space<vmem>>, vector<8x512xbf16>
    tpu.vector_store %arg12[%c24, %c0_44], %90 {strides = array<i32>} : memref<223x512xbf16, #tpu.memory_space<vmem>>, vector<8x512xbf16>,
    %c0_45 = arith.constant 0 : index
    %c383 = arith.constant 383 : index
    %92 = vector.load %arg11[%c0_45, %c383] : memref<8x1280xf32, #tpu.memory_space<vmem>>, vector<8x512xf32>
    %cst_46 = arith.constant 0.000000e+00 : f32
    %93 = vector.shape_cast %84 : vector<1x512xi1> to vector<1x512xi1>
    %94 = vector.broadcast %93 : vector<1x512xi1> to vector<8x512xi1>
    %95 = vector.broadcast %cst_46 : f32 to vector<8x512xf32>
    %96 = arith.select %94, %92, %95 : vector<8x512xi1>, vector<8x512xf32>
    %97 = arith.truncf %96 : vector<8x512xf32> to vector<8x512xbf16>
    %c96 = arith.constant 96 : index
    %c0_47 = arith.constant 0 : index
    %98 = vector.load %arg12[%c96, %c0_47] : memref<223x512xbf16, #tpu.memory_space<vmem>>, vector<8x512xbf16>
    tpu.vector_store %arg12[%c96, %c0_47], %97 {strides = array<i32>} : memref<223x512xbf16, #tpu.memory_space<vmem>>, vector<8x512xbf16>,
    %c0_48 = arith.constant 0 : index
    %c639 = arith.constant 639 : index
    %99 = vector.load %arg11[%c0_48, %c639] : memref<8x1280xf32, #tpu.memory_space<vmem>>, vector<8x512xf32>
    %cst_49 = arith.constant 0.000000e+00 : f32
    %100 = vector.shape_cast %84 : vector<1x512xi1> to vector<1x512xi1>
    %101 = vector.broadcast %100 : vector<1x512xi1> to vector<8x512xi1>
    %102 = vector.broadcast %cst_49 : f32 to vector<8x512xf32>
    %103 = arith.select %101, %99, %102 : vector<8x512xi1>, vector<8x512xf32>
    %104 = arith.truncf %103 : vector<8x512xf32> to vector<8x512xbf16>
    %c168 = arith.constant 168 : index
    %c0_50 = arith.constant 0 : index
    %105 = vector.load %arg12[%c168, %c0_50] : memref<223x512xbf16, #tpu.memory_space<vmem>>, vector<8x512xbf16>
    tpu.vector_store %arg12[%c168, %c0_50], %104 {strides = array<i32>} : memref<223x512xbf16, #tpu.memory_space<vmem>>, vector<8x512xbf16>,
    %c0_51 = arith.constant 0 : index
    %c128 = arith.constant 128 : index
    %106 = vector.load %arg11[%c0_51, %c128] : memref<8x1280xf32, #tpu.memory_space<vmem>>, vector<8x512xf32>
    %107 = arith.truncf %106 : vector<8x512xf32> to vector<8x512xbf16>
    %c32 = arith.constant 32 : index
    %c0_52 = arith.constant 0 : index
    %108 = vector.load %arg12[%c32, %c0_52] : memref<223x512xbf16, #tpu.memory_space<vmem>>, vector<8x512xbf16>
    tpu.vector_store %arg12[%c32, %c0_52], %107 {strides = array<i32>} : memref<223x512xbf16, #tpu.memory_space<vmem>>, vector<8x512xbf16>,
    %c0_53 = arith.constant 0 : index
    %c384 = arith.constant 384 : index
    %109 = vector.load %arg11[%c0_53, %c384] : memref<8x1280xf32, #tpu.memory_space<vmem>>, vector<8x512xf32>
    %110 = arith.truncf %109 : vector<8x512xf32> to vector<8x512xbf16>
    %c104 = arith.constant 104 : index
    %c0_54 = arith.constant 0 : index
    %111 = vector.load %arg12[%c104, %c0_54] : memref<223x512xbf16, #tpu.memory_space<vmem>>, vector<8x512xbf16>
    tpu.vector_store %arg12[%c104, %c0_54], %110 {strides = array<i32>} : memref<223x512xbf16, #tpu.memory_space<vmem>>, vector<8x512xbf16>,
    %c0_55 = arith.constant 0 : index
    %c640 = arith.constant 640 : index
    %112 = vector.load %arg11[%c0_55, %c640] : memref<8x1280xf32, #tpu.memory_space<vmem>>, vector<8x512xf32>
    %113 = arith.truncf %112 : vector<8x512xf32> to vector<8x512xbf16>
    %c176 = arith.constant 176 : index
    %c0_56 = arith.constant 0 : index
    %114 = vector.load %arg12[%c176, %c0_56] : memref<223x512xbf16, #tpu.memory_space<vmem>>, vector<8x512xbf16>
    tpu.vector_store %arg12[%c176, %c0_56], %113 {strides = array<i32>} : memref<223x512xbf16, #tpu.memory_space<vmem>>, vector<8x512xbf16>,
    %c5 = arith.constant 5 : index
    %c0_57 = arith.constant 0 : index
    %115 = vector.load %arg5[%c5, %c0_57] : memref<9x512xf32, #tpu.memory_space<vmem>>, vector<1x512xf32>
    %cst_58 = arith.constant 0.000000e+00 : f32
    %116 = vector.broadcast %cst_58 : f32 to vector<1x512xf32>
    %117 = arith.cmpf one, %115, %116 : vector<1x512xf32>
    %c0_59 = arith.constant 0 : index
    %c129 = arith.constant 129 : index
    %118 = vector.load %arg11[%c0_59, %c129] : memref<8x1280xf32, #tpu.memory_space<vmem>>, vector<8x512xf32>
    %cst_60 = arith.constant 0.000000e+00 : f32
    %119 = vector.shape_cast %117 : vector<1x512xi1> to vector<1x512xi1>
    %120 = vector.broadcast %119 : vector<1x512xi1> to vector<8x512xi1>
    %121 = vector.broadcast %cst_60 : f32 to vector<8x512xf32>
    %122 = arith.select %120, %118, %121 : vector<8x512xi1>, vector<8x512xf32>
    %123 = arith.truncf %122 : vector<8x512xf32> to vector<8x512xbf16>
    %c40 = arith.constant 40 : index
    %c0_61 = arith.constant 0 : index
    %124 = vector.load %arg12[%c40, %c0_61] : memref<223x512xbf16, #tpu.memory_space<vmem>>, vector<8x512xbf16>
    tpu.vector_store %arg12[%c40, %c0_61], %123 {strides = array<i32>} : memref<223x512xbf16, #tpu.memory_space<vmem>>, vector<8x512xbf16>,
    %c0_62 = arith.constant 0 : index
    %c385 = arith.constant 385 : index
    %125 = vector.load %arg11[%c0_62, %c385] : memref<8x1280xf32, #tpu.memory_space<vmem>>, vector<8x512xf32>
    %cst_63 = arith.constant 0.000000e+00 : f32
    %126 = vector.shape_cast %117 : vector<1x512xi1> to vector<1x512xi1>
    %127 = vector.broadcast %126 : vector<1x512xi1> to vector<8x512xi1>
    %128 = vector.broadcast %cst_63 : f32 to vector<8x512xf32>
    %129 = arith.select %127, %125, %128 : vector<8x512xi1>, vector<8x512xf32>
    %130 = arith.truncf %129 : vector<8x512xf32> to vector<8x512xbf16>
    %c112_64 = arith.constant 112 : index
    %c0_65 = arith.constant 0 : index
    %131 = vector.load %arg12[%c112_64, %c0_65] : memref<223x512xbf16, #tpu.memory_space<vmem>>, vector<8x512xbf16>
    tpu.vector_store %arg12[%c112_64, %c0_65], %130 {strides = array<i32>} : memref<223x512xbf16, #tpu.memory_space<vmem>>, vector<8x512xbf16>,
    %c0_66 = arith.constant 0 : index
    %c641 = arith.constant 641 : index
    %132 = vector.load %arg11[%c0_66, %c641] : memref<8x1280xf32, #tpu.memory_space<vmem>>, vector<8x512xf32>
    %cst_67 = arith.constant 0.000000e+00 : f32
    %133 = vector.shape_cast %117 : vector<1x512xi1> to vector<1x512xi1>
    %134 = vector.broadcast %133 : vector<1x512xi1> to vector<8x512xi1>
    %135 = vector.broadcast %cst_67 : f32 to vector<8x512xf32>
    %136 = arith.select %134, %132, %135 : vector<8x512xi1>, vector<8x512xf32>
    %137 = arith.truncf %136 : vector<8x512xf32> to vector<8x512xbf16>
    %c184 = arith.constant 184 : index
    %c0_68 = arith.constant 0 : index
    %138 = vector.load %arg12[%c184, %c0_68] : memref<223x512xbf16, #tpu.memory_space<vmem>>, vector<8x512xbf16>
    tpu.vector_store %arg12[%c184, %c0_68], %137 {strides = array<i32>} : memref<223x512xbf16, #tpu.memory_space<vmem>>, vector<8x512xbf16>,
    %c6 = arith.constant 6 : index
    %c0_69 = arith.constant 0 : index
    %139 = vector.load %arg5[%c6, %c0_69] : memref<9x512xf32, #tpu.memory_space<vmem>>, vector<1x512xf32>
    %cst_70 = arith.constant 0.000000e+00 : f32
    %140 = vector.broadcast %cst_70 : f32 to vector<1x512xf32>
    %141 = arith.cmpf one, %139, %140 : vector<1x512xf32>
    %c0_71 = arith.constant 0 : index
    %c143 = arith.constant 143 : index
    %142 = vector.load %arg11[%c0_71, %c143] : memref<8x1280xf32, #tpu.memory_space<vmem>>, vector<8x512xf32>
    %cst_72 = arith.constant 0.000000e+00 : f32
    %143 = vector.shape_cast %141 : vector<1x512xi1> to vector<1x512xi1>
    %144 = vector.broadcast %143 : vector<1x512xi1> to vector<8x512xi1>
    %145 = vector.broadcast %cst_72 : f32 to vector<8x512xf32>
    %146 = arith.select %144, %142, %145 : vector<8x512xi1>, vector<8x512xf32>
    %147 = arith.truncf %146 : vector<8x512xf32> to vector<8x512xbf16>
    %c48 = arith.constant 48 : index
    %c0_73 = arith.constant 0 : index
    %148 = vector.load %arg12[%c48, %c0_73] : memref<223x512xbf16, #tpu.memory_space<vmem>>, vector<8x512xbf16>
    tpu.vector_store %arg12[%c48, %c0_73], %147 {strides = array<i32>} : memref<223x512xbf16, #tpu.memory_space<vmem>>, vector<8x512xbf16>,
    %c0_74 = arith.constant 0 : index
    %c399 = arith.constant 399 : index
    %149 = vector.load %arg11[%c0_74, %c399] : memref<8x1280xf32, #tpu.memory_space<vmem>>, vector<8x512xf32>
    %cst_75 = arith.constant 0.000000e+00 : f32
    %150 = vector.shape_cast %141 : vector<1x512xi1> to vector<1x512xi1>
    %151 = vector.broadcast %150 : vector<1x512xi1> to vector<8x512xi1>
    %152 = vector.broadcast %cst_75 : f32 to vector<8x512xf32>
    %153 = arith.select %151, %149, %152 : vector<8x512xi1>, vector<8x512xf32>
    %154 = arith.truncf %153 : vector<8x512xf32> to vector<8x512xbf16>
    %c120 = arith.constant 120 : index
    %c0_76 = arith.constant 0 : index
    %155 = vector.load %arg12[%c120, %c0_76] : memref<223x512xbf16, #tpu.memory_space<vmem>>, vector<8x512xbf16>
    tpu.vector_store %arg12[%c120, %c0_76], %154 {strides = array<i32>} : memref<223x512xbf16, #tpu.memory_space<vmem>>, vector<8x512xbf16>,
    %c0_77 = arith.constant 0 : index
    %c655 = arith.constant 655 : index
    %156 = vector.load %arg11[%c0_77, %c655] : memref<8x1280xf32, #tpu.memory_space<vmem>>, vector<8x512xf32>
    %cst_78 = arith.constant 0.000000e+00 : f32
    %157 = vector.shape_cast %141 : vector<1x512xi1> to vector<1x512xi1>
    %158 = vector.broadcast %157 : vector<1x512xi1> to vector<8x512xi1>
    %159 = vector.broadcast %cst_78 : f32 to vector<8x512xf32>
    %160 = arith.select %158, %156, %159 : vector<8x512xi1>, vector<8x512xf32>
    %161 = arith.truncf %160 : vector<8x512xf32> to vector<8x512xbf16>
    %c192 = arith.constant 192 : index
    %c0_79 = arith.constant 0 : index
    %162 = vector.load %arg12[%c192, %c0_79] : memref<223x512xbf16, #tpu.memory_space<vmem>>, vector<8x512xbf16>
    tpu.vector_store %arg12[%c192, %c0_79], %161 {strides = array<i32>} : memref<223x512xbf16, #tpu.memory_space<vmem>>, vector<8x512xbf16>,
    %c7 = arith.constant 7 : index
    %c0_80 = arith.constant 0 : index
    %163 = vector.load %arg5[%c7, %c0_80] : memref<9x512xf32, #tpu.memory_space<vmem>>, vector<1x512xf32>
    %cst_81 = arith.constant 0.000000e+00 : f32
    %164 = vector.broadcast %cst_81 : f32 to vector<1x512xf32>
    %165 = arith.cmpf one, %163, %164 : vector<1x512xf32>
    %c0_82 = arith.constant 0 : index
    %c144_83 = arith.constant 144 : index
    %166 = vector.load %arg11[%c0_82, %c144_83] : memref<8x1280xf32, #tpu.memory_space<vmem>>, vector<8x512xf32>
    %cst_84 = arith.constant 0.000000e+00 : f32
    %167 = vector.shape_cast %165 : vector<1x512xi1> to vector<1x512xi1>
    %168 = vector.broadcast %167 : vector<1x512xi1> to vector<8x512xi1>
    %169 = vector.broadcast %cst_84 : f32 to vector<8x512xf32>
    %170 = arith.select %168, %166, %169 : vector<8x512xi1>, vector<8x512xf32>
    %171 = arith.truncf %170 : vector<8x512xf32> to vector<8x512xbf16>
    %c56 = arith.constant 56 : index
    %c0_85 = arith.constant 0 : index
    %172 = vector.load %arg12[%c56, %c0_85] : memref<223x512xbf16, #tpu.memory_space<vmem>>, vector<8x512xbf16>
    tpu.vector_store %arg12[%c56, %c0_85], %171 {strides = array<i32>} : memref<223x512xbf16, #tpu.memory_space<vmem>>, vector<8x512xbf16>,
    %c0_86 = arith.constant 0 : index
    %c400 = arith.constant 400 : index
    %173 = vector.load %arg11[%c0_86, %c400] : memref<8x1280xf32, #tpu.memory_space<vmem>>, vector<8x512xf32>
    %cst_87 = arith.constant 0.000000e+00 : f32
    %174 = vector.shape_cast %165 : vector<1x512xi1> to vector<1x512xi1>
    %175 = vector.broadcast %174 : vector<1x512xi1> to vector<8x512xi1>
    %176 = vector.broadcast %cst_87 : f32 to vector<8x512xf32>
    %177 = arith.select %175, %173, %176 : vector<8x512xi1>, vector<8x512xf32>
    %178 = arith.truncf %177 : vector<8x512xf32> to vector<8x512xbf16>
    %c128_88 = arith.constant 128 : index
    %c0_89 = arith.constant 0 : index
    %179 = vector.load %arg12[%c128_88, %c0_89] : memref<223x512xbf16, #tpu.memory_space<vmem>>, vector<8x512xbf16>
    tpu.vector_store %arg12[%c128_88, %c0_89], %178 {strides = array<i32>} : memref<223x512xbf16, #tpu.memory_space<vmem>>, vector<8x512xbf16>,
    %c0_90 = arith.constant 0 : index
    %c656 = arith.constant 656 : index
    %180 = vector.load %arg11[%c0_90, %c656] : memref<8x1280xf32, #tpu.memory_space<vmem>>, vector<8x512xf32>
    %cst_91 = arith.constant 0.000000e+00 : f32
    %181 = vector.shape_cast %165 : vector<1x512xi1> to vector<1x512xi1>
    %182 = vector.broadcast %181 : vector<1x512xi1> to vector<8x512xi1>
    %183 = vector.broadcast %cst_91 : f32 to vector<8x512xf32>
    %184 = arith.select %182, %180, %183 : vector<8x512xi1>, vector<8x512xf32>
    %185 = arith.truncf %184 : vector<8x512xf32> to vector<8x512xbf16>
    %c200 = arith.constant 200 : index
    %c0_92 = arith.constant 0 : index
    %186 = vector.load %arg12[%c200, %c0_92] : memref<223x512xbf16, #tpu.memory_space<vmem>>, vector<8x512xbf16>
    tpu.vector_store %arg12[%c200, %c0_92], %185 {strides = array<i32>} : memref<223x512xbf16, #tpu.memory_space<vmem>>, vector<8x512xbf16>,
    %c8_93 = arith.constant 8 : index
    %c0_94 = arith.constant 0 : index
    %187 = vector.load %arg5[%c8_93, %c0_94] : memref<9x512xf32, #tpu.memory_space<vmem>>, vector<1x512xf32>
    %cst_95 = arith.constant 0.000000e+00 : f32
    %188 = vector.broadcast %cst_95 : f32 to vector<1x512xf32>
    %189 = arith.cmpf one, %187, %188 : vector<1x512xf32>
    %c0_96 = arith.constant 0 : index
    %c145 = arith.constant 145 : index
    %190 = vector.load %arg11[%c0_96, %c145] : memref<8x1280xf32, #tpu.memory_space<vmem>>, vector<8x512xf32>
    %cst_97 = arith.constant 0.000000e+00 : f32
    %191 = vector.shape_cast %189 : vector<1x512xi1> to vector<1x512xi1>
    %192 = vector.broadcast %191 : vector<1x512xi1> to vector<8x512xi1>
    %193 = vector.broadcast %cst_97 : f32 to vector<8x512xf32>
    %194 = arith.select %192, %190, %193 : vector<8x512xi1>, vector<8x512xf32>
    %195 = arith.truncf %194 : vector<8x512xf32> to vector<8x512xbf16>
    %c64 = arith.constant 64 : index
    %c0_98 = arith.constant 0 : index
    %196 = vector.load %arg12[%c64, %c0_98] : memref<223x512xbf16, #tpu.memory_space<vmem>>, vector<8x512xbf16>
    tpu.vector_store %arg12[%c64, %c0_98], %195 {strides = array<i32>} : memref<223x512xbf16, #tpu.memory_space<vmem>>, vector<8x512xbf16>,
    %c0_99 = arith.constant 0 : index
    %c401 = arith.constant 401 : index
    %197 = vector.load %arg11[%c0_99, %c401] : memref<8x1280xf32, #tpu.memory_space<vmem>>, vector<8x512xf32>
    %cst_100 = arith.constant 0.000000e+00 : f32
    %198 = vector.shape_cast %189 : vector<1x512xi1> to vector<1x512xi1>
    %199 = vector.broadcast %198 : vector<1x512xi1> to vector<8x512xi1>
    %200 = vector.broadcast %cst_100 : f32 to vector<8x512xf32>
    %201 = arith.select %199, %197, %200 : vector<8x512xi1>, vector<8x512xf32>
    %202 = arith.truncf %201 : vector<8x512xf32> to vector<8x512xbf16>
    %c136 = arith.constant 136 : index
    %c0_101 = arith.constant 0 : index
    %203 = vector.load %arg12[%c136, %c0_101] : memref<223x512xbf16, #tpu.memory_space<vmem>>, vector<8x512xbf16>
    tpu.vector_store %arg12[%c136, %c0_101], %202 {strides = array<i32>} : memref<223x512xbf16, #tpu.memory_space<vmem>>, vector<8x512xbf16>,
    %c0_102 = arith.constant 0 : index
    %c657 = arith.constant 657 : index
    %204 = vector.load %arg11[%c0_102, %c657] : memref<8x1280xf32, #tpu.memory_space<vmem>>, vector<8x512xf32>
    %cst_103 = arith.constant 0.000000e+00 : f32
    %205 = vector.shape_cast %189 : vector<1x512xi1> to vector<1x512xi1>
    %206 = vector.broadcast %205 : vector<1x512xi1> to vector<8x512xi1>
    %207 = vector.broadcast %cst_103 : f32 to vector<8x512xf32>
    %208 = arith.select %206, %204, %207 : vector<8x512xi1>, vector<8x512xf32>
    %209 = arith.truncf %208 : vector<8x512xf32> to vector<8x512xbf16>
    %c208 = arith.constant 208 : index
    %c0_104 = arith.constant 0 : index
    %210 = vector.load %arg12[%c208, %c0_104] : memref<223x512xbf16, #tpu.memory_space<vmem>>, vector<8x512xbf16>
    tpu.vector_store %arg12[%c208, %c0_104], %209 {strides = array<i32>} : memref<223x512xbf16, #tpu.memory_space<vmem>>, vector<8x512xbf16>,
    %c0_105 = arith.constant 0 : index
    %c0_106 = arith.constant 0 : index
    %c0_107 = arith.constant 0 : index
    %211 = vector.load %arg4[%c0_105, %c0_106, %c0_107] : memref<1x6x512xf32, #tpu.memory_space<vmem>>, vector<1x6x512xf32>
    %212 = vector.shape_cast %211 : vector<1x6x512xf32> to vector<6x512xf32>
    %213 = arith.truncf %212 : vector<6x512xf32> to vector<6x512xbf16>
    %c216 = arith.constant 216 : index
    %c0_108 = arith.constant 0 : index
    %214 = vector.load %arg12[%c216, %c0_108] : memref<223x512xbf16, #tpu.memory_space<vmem>>, vector<6x512xbf16>
    tpu.vector_store %arg12[%c216, %c0_108], %213 {strides = array<i32>} : memref<223x512xbf16, #tpu.memory_space<vmem>>, vector<6x512xbf16>,
    %cst_109 = arith.constant 1.000000e+00 : bf16
    %215 = vector.broadcast %cst_109 : bf16 to vector<1x512xbf16>
    %c222 = arith.constant 222 : index
    %c0_110 = arith.constant 0 : index
    %216 = vector.load %arg12[%c222, %c0_110] : memref<223x512xbf16, #tpu.memory_space<vmem>>, vector<1x512xbf16>
    tpu.vector_store %arg12[%c222, %c0_110], %215 {strides = array<i32>} : memref<223x512xbf16, #tpu.memory_space<vmem>>, vector<1x512xbf16>,
    %c0_111 = arith.constant 0 : index
    %c0_112 = arith.constant 0 : index
    %217 = vector.load %arg6[%c0_111, %c0_112] : memref<16x223xbf16, #tpu.memory_space<vmem>>, vector<16x223xbf16>
    %c0_113 = arith.constant 0 : index
    %c0_114 = arith.constant 0 : index
    %218 = vector.load %arg12[%c0_113, %c0_114] : memref<223x512xbf16, #tpu.memory_space<vmem>>, vector<223x512xbf16>
    %cst_115 = arith.constant dense<0.000000e+00> : vector<16x512xf32>
    %219 = tpu.matmul %217, %218, %cst_115 {dimension_numbers = #tpu.dot_dimension_numbers<[1], [0], [0], [1], [0, 0, 1, 1], [], []>} : vector<16x223xbf16>, vector<223x512xbf16>, vector<16x512xf32> -> vector<16x512xf32>
    %220 = vector.extract_strided_slice %219 {offsets = [0, 0], sizes = [8, 512], strides = [1, 1]} : vector<16x512xf32> to vector<8x512xf32>
    %221 = arith.negf %220 : vector<8x512xf32>
    %222 = math.exp %221 : vector<8x512xf32>
    %cst_116 = arith.constant 1.000000e+00 : f32
    %223 = vector.broadcast %cst_116 : f32 to vector<8x512xf32>
    %224 = arith.addf %223, %222 : vector<8x512xf32>
    %225 = arith.divf %223, %224 : vector<8x512xf32>
    %226 = vector.extract_strided_slice %219 {offsets = [8, 0], sizes = [8, 512], strides = [1, 1]} : vector<16x512xf32> to vector<8x512xf32>
    %227 = math.tanh %226 : vector<8x512xf32>
    %228 = arith.mulf %225, %227 : vector<8x512xf32>
    %c0_117 = arith.constant 0 : index
    %c0_118 = arith.constant 0 : index
    %229 = vector.load %arg7[%c0_117, %c0_118] : memref<16x8xf32, #tpu.memory_space<vmem>>, vector<16x8xf32>
    %cst_119 = arith.constant dense<0.000000e+00> : vector<16x512xf32>
    %230 = tpu.matmul %229, %228, %cst_119 {dimension_numbers = #tpu.dot_dimension_numbers<[1], [0], [0], [1], [0, 0, 1, 1], [], []>} : vector<16x8xf32>, vector<8x512xf32>, vector<16x512xf32> -> vector<16x512xf32>
    %c0_120 = arith.constant 0 : index
    %c0_121 = arith.constant 0 : index
    %231 = vector.load %arg8[%c0_120, %c0_121] : memref<16x1xf32, #tpu.memory_space<vmem>>, vector<16x1xf32>
    %232 = vector.broadcast %231 : vector<16x1xf32> to vector<16x512xf32>
    %233 = arith.addf %230, %232 : vector<16x512xf32>
    %c0_122 = arith.constant 0 : index
    %c384_123 = arith.constant 384 : index
    %234 = vector.load %arg11[%c0_122, %c384_123] : memref<8x1280xf32, #tpu.memory_space<vmem>>, vector<8x512xf32>
    %235 = vector.broadcast %3 : vector<8x1xf32> to vector<8x512xf32>
    %236 = arith.subf %234, %235 : vector<8x512xf32>
    %237 = vector.extract_strided_slice %233 {offsets = [0, 0], sizes = [8, 512], strides = [1, 1]} : vector<16x512xf32> to vector<8x512xf32>
    %238 = arith.addf %236, %237 : vector<8x512xf32>
    %cst_124 = arith.constant 0.707106769 : f32
    %239 = vector.broadcast %cst_124 : f32 to vector<8x512xf32>
    %240 = arith.mulf %238, %239 : vector<8x512xf32>
    %c0_125 = arith.constant 0 : index
    %c0_126 = arith.constant 0 : index
    %c0_127 = arith.constant 0 : index
    %241 = vector.load %arg9[%c0_125, %c0_126, %c0_127] : memref<1x8x512xf32, #tpu.memory_space<vmem>>, vector<1x8x512xf32>
    %242 = vector.shape_cast %241 : vector<1x8x512xf32> to vector<8x512xf32>
    %243 = vector.shape_cast %240 : vector<8x512xf32> to vector<1x8x512xf32>
    tpu.vector_store %arg9[%c0_125, %c0_126, %c0_127], %243 {strides = array<i32>} : memref<1x8x512xf32, #tpu.memory_space<vmem>>, vector<1x8x512xf32>,
    %244 = vector.extract_strided_slice %233 {offsets = [8, 0], sizes = [8, 512], strides = [1, 1]} : vector<16x512xf32> to vector<8x512xf32>
    %c0_128 = arith.constant 0 : index
    %c0_129 = arith.constant 0 : index
    %c0_130 = arith.constant 0 : index
    %245 = vector.load %arg10[%c0_128, %c0_129, %c0_130] : memref<1x8x512xf32, #tpu.memory_space<vmem>>, vector<1x8x512xf32>
    %246 = vector.shape_cast %245 : vector<1x8x512xf32> to vector<8x512xf32>
    %247 = vector.shape_cast %244 : vector<8x512xf32> to vector<1x8x512xf32>
    tpu.vector_store %arg10[%c0_128, %c0_129, %c0_130], %247 {strides = array<i32>} : memref<1x8x512xf32, #tpu.memory_space<vmem>>, vector<1x8x512xf32>,
    return
  }
  func.func @transform_0(%arg0: i32, %arg1: i32) -> (i32, i32, i32) {
    %c0_i32 = arith.constant 0 : i32
    %c0_i32_0 = arith.constant 0 : i32
    %c0_i32_1 = arith.constant 0 : i32
    return %arg0, %c0_i32, %c0_i32_0 : i32, i32, i32
  }
  func.func @transform_1(%arg0: i32, %arg1: i32) -> (i32, i32, i32) {
    %c0_i32 = arith.constant 0 : i32
    %c0_i32_0 = arith.constant 0 : i32
    %c0_i32_1 = arith.constant 0 : i32
    return %arg0, %c0_i32, %c0_i32_0 : i32, i32, i32
  }
  func.func @transform_2(%arg0: i32, %arg1: i32) -> (i32, i32, i32) {
    %c0_i32 = arith.constant 0 : i32
    %c0_i32_0 = arith.constant 0 : i32
    return %arg0, %c0_i32, %arg1 : i32, i32, i32
  }
  func.func @transform_3(%arg0: i32, %arg1: i32) -> (i32, i32) {
    %c0_i32 = arith.constant 0 : i32
    %c0_i32_0 = arith.constant 0 : i32
    %c0_i32_1 = arith.constant 0 : i32
    return %c0_i32, %c0_i32_0 : i32, i32
  }
  func.func @transform_4(%arg0: i32, %arg1: i32) -> (i32, i32) {
    %c0_i32 = arith.constant 0 : i32
    %c0_i32_0 = arith.constant 0 : i32
    %c0_i32_1 = arith.constant 0 : i32
    return %c0_i32, %c0_i32_0 : i32, i32
  }
  func.func @transform_5(%arg0: i32, %arg1: i32) -> (i32, i32) {
    %c0_i32 = arith.constant 0 : i32
    %c0_i32_0 = arith.constant 0 : i32
    %c0_i32_1 = arith.constant 0 : i32
    return %c0_i32, %c0_i32_0 : i32, i32
  }
  func.func @transform_6(%arg0: i32, %arg1: i32) -> (i32, i32) {
    %c0_i32 = arith.constant 0 : i32
    %c0_i32_0 = arith.constant 0 : i32
    %c0_i32_1 = arith.constant 0 : i32
    return %c0_i32, %c0_i32_0 : i32, i32
  }
  func.func @transform_7(%arg0: i32, %arg1: i32) -> (i32, i32, i32) {
    %c0_i32 = arith.constant 0 : i32
    %c0_i32_0 = arith.constant 0 : i32
    return %arg0, %c0_i32, %arg1 : i32, i32, i32
  }
  func.func @transform_8(%arg0: i32, %arg1: i32) -> (i32, i32, i32) {
    %c0_i32 = arith.constant 0 : i32
    %c0_i32_0 = arith.constant 0 : i32
    return %arg0, %c0_i32, %arg1 : i32, i32, i32
  }
}

</mosaic_0001>

<llo_original>
// kernel: diffwave3d_block.1
$region0: #{diffwave3d_block.1}
  #allocation0 [shape = 'u32[]', space=smem, size = 0x4, offset = 0x4, fixed_abs, tag = 'smem constant byte address 0x4 - core index']
  #allocation1 [shape = 'u32[144,128]{1,0:T(1,128)}', space=vmem, size = 0x12000, scoped, tag = 'internal scratch']
  #allocation2 [shape = 'f32[8,1280]{1,0:T(8,128)}', space=vmem, size = 0xa000, scoped, tag = 'scratch operand']
  #allocation3 [shape = 'bf16[223,512]{1,0:T(8,128)(2,1)}', space=vmem, size = 0x38000, scoped, tag = 'scratch operand']
  %s0 = inlined_call_operand.vmem [shape: f32[2,8,1792], index: 0, kind: input, shape index: {}]
  %s1 = inlined_call_operand.vmem [shape: f32[2,8,1], index: 1, kind: input, shape index: {}]
  %s2 = inlined_call_operand.vmem [shape: f32[2,6,1024], index: 2, kind: input, shape index: {}]
  %s3 = inlined_call_operand.vmem [shape: f32[9,512], index: 3, kind: input, shape index: {}]
  %s4 = inlined_call_operand.vmem [shape: bf16[16,223], index: 4, kind: input, shape index: {}]
  %s5 = inlined_call_operand.vmem [shape: f32[16,8], index: 5, kind: input, shape index: {}]
  %s6 = inlined_call_operand.vmem [shape: f32[16,1], index: 6, kind: input, shape index: {}]
  %s7 = inlined_call_operand.vmem [shape: f32[2,8,1024], index: 7, kind: output, shape index: {0}]
  %s8 = inlined_call_operand.vmem [shape: f32[2,8,1024], index: 8, kind: output, shape index: {1}]
  %9 = xla_tuple %s7, %s8
  %s10 = sld [smem:[#allocation0]]
  $region69: #{diffwave3d_block.1} parent=0
    _
  %s12 = ssub.s32 1, %s10
  %s13 = scalar_select 0, %s12, %s10
  loop: start=0, step=1, limit=6
  $region2: #{diffwave3d_block.1} parent=0 // loop_pre_header
    _
  $region3: #{diffwave3d_block.1} parent=0 // loop_header
    %s15 = sphi 0, %s19
    %p16 = scmp.ge.s32.totalorder %s15, 6
    %s22 = sphi 0, %s34
    %s23 = sphi 0, %s30
    %s24 = sphi 0, %s22
    %s25 = sphi 0, %s23
    %s26 = sphi 0, %s24
    %s27 = sphi 0, %s25
    %s37 = sphi 0, %s39
    %s40 = sphi 0, %s37
    %s41 = sphi 0, %s40
    %s57 = sphi 0, %s41
    %s63 = sphi 0, %s65
    %s66 = sphi 0, %s63
    %s67 = sphi 0, %s66
    %s83 = sphi 0, %s67
    %s91 = sphi 0, %s93
    %s94 = sphi 0, %s91
    %s95 = sphi 0, %s94
    %s111 = sphi 0, %s95
    %s115 = sphi 0, %s115
    %s117 = sphi 0, %s115
    %s118 = sphi 0, %s117
    %s132 = sphi 0, %s118
    %s136 = sphi 0, %s136
    %s138 = sphi 0, %s136
    %s139 = sphi 0, %s138
    %s153 = sphi 0, %s139
    %s157 = sphi 0, %s157
    %s159 = sphi 0, %s157
    %s160 = sphi 0, %s159
    %s174 = sphi 0, %s160
    %s178 = sphi 0, %s178
    %s180 = sphi 0, %s178
    %s181 = sphi 0, %s180
    %s195 = sphi 0, %s181
    %s203 = sphi 0, %s205
    %s206 = sphi 0, %s203
    %s207 = sphi 0, %s206
    %s223 = sphi 0, %s207
    %s231 = sphi 0, %s233
    %s234 = sphi 0, %s231
    %s235 = sphi 0, %s234
    %s251 = sphi 0, %s235
  $region4: #{diffwave3d_block.1} parent=0 // loop_header_branch
    %18 = sbr.rel (%p16) target = $region8
  $region5: #{diffwave3d_block.1} parent=0 // loop_body
    %s20 = ssub.s32 %s15, 1
    %s21 = ssub.s32 %s15, 2
    %s28 = sadd.s32 1, %s23
    %p29 = scmp.ge.s32.totalorder %s28, 2
    %s30 = scalar_select %p29, 0, %s28
    %s31 = sadd.s32 1, %s22
    %s32 = scalar_select %p29, %s31, %s22
    %p33 = scmp.ge.s32.totalorder %s32, 2
    %s34 = scalar_select %p33, 0, %s32
    %s35 = ssub.s32 %s22, %s34
    %p36 = scmp.eq.s32.totalorder %s35, 0
    %s38 = sadd.s32 %s37, 1
    %s39 = scalar_select %p36, %s37, %s38
    %p42 = pneg %p36
    %p43 = scmp.eq.s32.totalorder %s15, 3
    %p44 = por %p42, %p43
    %p45 = scmp.ne.s32.totalorder %s37, %s40
    %p46 = scmp.eq.s32.totalorder %s15, 0
    %p47 = por %p45, %p46
    %p48 = scmp.ne.s32.totalorder %s37, %s40
    %p49 = scmp.eq.s32.totalorder %s20, 3
    %p50 = por %p48, %p49
    %p51 = scmp.ne.s32.totalorder %s40, %s41
    %p52 = scmp.eq.s32.totalorder %s20, 0
    %p53 = por %p51, %p52
    %p54 = scmp.ne.s32.totalorder %s40, %s41
    %p55 = scmp.eq.s32.totalorder %s21, 3
    %p56 = por %p54, %p55
    %p58 = scmp.ne.s32.totalorder %s41, %s57
    %p59 = scmp.eq.s32.totalorder %s21, 0
    %p60 = por %p58, %p59
    %s61 = ssub.s32 %s22, %s34
    %p62 = scmp.eq.s32.totalorder %s61, 0
    %s64 = sadd.s32 %s63, 1
    %s65 = scalar_select %p62, %s63, %s64
    %p68 = pneg %p62
    %p69 = scmp.eq.s32.totalorder %s15, 3
    %p70 = por %p68, %p69
    %p71 = scmp.ne.s32.totalorder %s63, %s66
    %p72 = scmp.eq.s32.totalorder %s15, 0
    %p73 = por %p71, %p72
    %p74 = scmp.ne.s32.totalorder %s63, %s66
    %p75 = scmp.eq.s32.totalorder %s20, 3
    %p76 = por %p74, %p75
    %p77 = scmp.ne.s32.totalorder %s66, %s67
    %p78 = scmp.eq.s32.totalorder %s20, 0
    %p79 = por %p77, %p78
    %p80 = scmp.ne.s32.totalorder %s66, %s67
    %p81 = scmp.eq.s32.totalorder %s21, 3
    %p82 = por %p80, %p81
    %p84 = scmp.ne.s32.totalorder %s67, %s83
    %p85 = scmp.eq.s32.totalorder %s21, 0
    %p86 = por %p84, %p85
    %s87 = ssub.s32 %s22, %s34
    %s88 = ssub.s32 %s23, %s30
    %s89 = sor.u32 %s87, %s88
    %p90 = scmp.eq.s32.totalorder %s89, 0
    %s92 = sadd.s32 %s91, 1
    %s93 = scalar_select %p90, %s91, %s92
    %p96 = pneg %p90
    %p97 = scmp.eq.s32.totalorder %s15, 3
    %p98 = por %p96, %p97
    %p99 = scmp.ne.s32.totalorder %s91, %s94
    %p100 = scmp.eq.s32.totalorder %s15, 0
    %p101 = por %p99, %p100
    %p102 = scmp.ne.s32.totalorder %s91, %s94
    %p103 = scmp.eq.s32.totalorder %s20, 3
    %p104 = por %p102, %p103
    %p105 = scmp.ne.s32.totalorder %s94, %s95
    %p106 = scmp.eq.s32.totalorder %s20, 0
    %p107 = por %p105, %p106
    %p108 = scmp.ne.s32.totalorder %s94, %s95
    %p109 = scmp.eq.s32.totalorder %s21, 3
    %p110 = por %p108, %p109
    %p112 = scmp.ne.s32.totalorder %s95, %s111
    %p113 = scmp.eq.s32.totalorder %s21, 0
    %p114 = por %p112, %p113
    %s116 = sadd.s32 %s115, 1
    %p119 = scmp.eq.s32.totalorder %s15, 3
    %p120 = scmp.ne.s32.totalorder %s115, %s117
    %p121 = scmp.eq.s32.totalorder %s15, 0
    %p122 = por %p120, %p121
    %p123 = scmp.ne.s32.totalorder %s115, %s117
    %p124 = scmp.eq.s32.totalorder %s20, 3
    %p125 = por %p123, %p124
    %p126 = scmp.ne.s32.totalorder %s117, %s118
    %p127 = scmp.eq.s32.totalorder %s20, 0
    %p128 = por %p126, %p127
    %p129 = scmp.ne.s32.totalorder %s117, %s118
    %p130 = scmp.eq.s32.totalorder %s21, 3
    %p131 = por %p129, %p130
    %p133 = scmp.ne.s32.totalorder %s118, %s132
    %p134 = scmp.eq.s32.totalorder %s21, 0
    %p135 = por %p133, %p134
    %s137 = sadd.s32 %s136, 1
    %p140 = scmp.eq.s32.totalorder %s15, 3
    %p141 = scmp.ne.s32.totalorder %s136, %s138
    %p142 = scmp.eq.s32.totalorder %s15, 0
    %p143 = por %p141, %p142
    %p144 = scmp.ne.s32.totalorder %s136, %s138
    %p145 = scmp.eq.s32.totalorder %s20, 3
    %p146 = por %p144, %p145
    %p147 = scmp.ne.s32.totalorder %s138, %s139
    %p148 = scmp.eq.s32.totalorder %s20, 0
    %p149 = por %p147, %p148
    %p150 = scmp.ne.s32.totalorder %s138, %s139
    %p151 = scmp.eq.s32.totalorder %s21, 3
    %p152 = por %p150, %p151
    %p154 = scmp.ne.s32.totalorder %s139, %s153
    %p155 = scmp.eq.s32.totalorder %s21, 0
    %p156 = por %p154, %p155
    %s158 = sadd.s32 %s157, 1
    %p161 = scmp.eq.s32.totalorder %s15, 3
    %p162 = scmp.ne.s32.totalorder %s157, %s159
    %p163 = scmp.eq.s32.totalorder %s15, 0
    %p164 = por %p162, %p163
    %p165 = scmp.ne.s32.totalorder %s157, %s159
    %p166 = scmp.eq.s32.totalorder %s20, 3
    %p167 = por %p165, %p166
    %p168 = scmp.ne.s32.totalorder %s159, %s160
    %p169 = scmp.eq.s32.totalorder %s20, 0
    %p170 = por %p168, %p169
    %p171 = scmp.ne.s32.totalorder %s159, %s160
    %p172 = scmp.eq.s32.totalorder %s21, 3
    %p173 = por %p171, %p172
    %p175 = scmp.ne.s32.totalorder %s160, %s174
    %p176 = scmp.eq.s32.totalorder %s21, 0
    %p177 = por %p175, %p176
    %s179 = sadd.s32 %s178, 1
    %p182 = scmp.eq.s32.totalorder %s15, 3
    %p183 = scmp.ne.s32.totalorder %s178, %s180
    %p184 = scmp.eq.s32.totalorder %s15, 0
    %p185 = por %p183, %p184
    %p186 = scmp.ne.s32.totalorder %s178, %s180
    %p187 = scmp.eq.s32.totalorder %s20, 3
    %p188 = por %p186, %p187
    %p189 = scmp.ne.s32.totalorder %s180, %s181
    %p190 = scmp.eq.s32.totalorder %s20, 0
    %p191 = por %p189, %p190
    %p192 = scmp.ne.s32.totalorder %s180, %s181
    %p193 = scmp.eq.s32.totalorder %s21, 3
    %p194 = por %p192, %p193
    %p196 = scmp.ne.s32.totalorder %s181, %s195
    %p197 = scmp.eq.s32.totalorder %s21, 0
    %p198 = por %p196, %p197
    %s199 = ssub.s32 %s22, %s34
    %s200 = ssub.s32 %s23, %s30
    %s201 = sor.u32 %s199, %s200
    %p202 = scmp.eq.s32.totalorder %s201, 0
    %s204 = sadd.s32 %s203, 1
    %s205 = scalar_select %p202, %s203, %s204
    %p208 = pneg %p202
    %p209 = scmp.eq.s32.totalorder %s15, 3
    %p210 = por %p208, %p209
    %p211 = scmp.ne.s32.totalorder %s203, %s206
    %p212 = scmp.eq.s32.totalorder %s15, 0
    %p213 = por %p211, %p212
    %p214 = scmp.ne.s32.totalorder %s203, %s206
    %p215 = scmp.eq.s32.totalorder %s20, 3
    %p216 = por %p214, %p215
    %p217 = scmp.ne.s32.totalorder %s206, %s207
    %p218 = scmp.eq.s32.totalorder %s20, 0
    %p219 = por %p217, %p218
    %p220 = scmp.ne.s32.totalorder %s206, %s207
    %p221 = scmp.eq.s32.totalorder %s21, 3
    %p222 = por %p220, %p221
    %p224 = scmp.ne.s32.totalorder %s207, %s223
    %p225 = scmp.eq.s32.totalorder %s21, 0
    %p226 = por %p224, %p225
    %s227 = ssub.s32 %s22, %s34
    %s228 = ssub.s32 %s23, %s30
    %s229 = sor.u32 %s227, %s228
    %p230 = scmp.eq.s32.totalorder %s229, 0
    %s232 = sadd.s32 %s231, 1
    %s233 = scalar_select %p230, %s231, %s232
    %p236 = pneg %p230
    %p237 = scmp.eq.s32.totalorder %s15, 3
    %p238 = por %p236, %p237
    %p239 = scmp.ne.s32.totalorder %s231, %s234
    %p240 = scmp.eq.s32.totalorder %s15, 0
    %p241 = por %p239, %p240
    %p242 = scmp.ne.s32.totalorder %s231, %s234
    %p243 = scmp.eq.s32.totalorder %s20, 3
    %p244 = por %p242, %p243
    %p245 = scmp.ne.s32.totalorder %s234, %s235
    %p246 = scmp.eq.s32.totalorder %s20, 0
    %p247 = por %p245, %p246
    %p248 = scmp.ne.s32.totalorder %s234, %s235
    %p249 = scmp.eq.s32.totalorder %s21, 3
    %p250 = por %p248, %p249
    %p252 = scmp.ne.s32.totalorder %s235, %s251
    %p253 = scmp.eq.s32.totalorder %s21, 0
    %p254 = por %p252, %p253
    %p255 = scmp.le.s32.totalorder 1, %s15
    %p256 = scmp.lt.s32.totalorder %s15, 5
    %p257 = pnand %p255, %p256
    %p258 = pneg %p257
    // Predicated region
    $region9: #{diffwave3d_block.1} parent=5 // pred_check
      _
    $region10: #{diffwave3d_block.1} parent=5 // pred_check_branch
      %260 = sbr.rel (%p257) target = $region12
    $region11: #{diffwave3d_block.1} parent=5 // pred_region
      %s261 = ssub.s32 %s15, 1
      // Predicated region
      $region13: #{diffwave3d_block.1} parent=11 // pred_check
        %p262 = pneg %p128
      $region14: #{diffwave3d_block.1} parent=11 // pred_check_branch
        %264 = sbr.rel (%p262) target = $region16
      $region15: #{diffwave3d_block.1} parent=11 // pred_region
        _
      $region16: #{diffwave3d_block.1} parent=11 // pred_fallthru
        _
      // Predicated region
      $region17: #{diffwave3d_block.1} parent=11 // pred_check
        %p265 = pneg %p149
      $region18: #{diffwave3d_block.1} parent=11 // pred_check_branch
        %267 = sbr.rel (%p265) target = $region20
      $region19: #{diffwave3d_block.1} parent=11 // pred_region
        _
      $region20: #{diffwave3d_block.1} parent=11 // pred_fallthru
        _
      // Predicated region
      $region21: #{diffwave3d_block.1} parent=11 // pred_check
        %p268 = pneg %p170
      $region22: #{diffwave3d_block.1} parent=11 // pred_check_branch
        %270 = sbr.rel (%p268) target = $region24
      $region23: #{diffwave3d_block.1} parent=11 // pred_region
        _
      $region24: #{diffwave3d_block.1} parent=11 // pred_fallthru
        _
      // Predicated region
      $region25: #{diffwave3d_block.1} parent=11 // pred_check
        %p271 = pneg %p191
      $region26: #{diffwave3d_block.1} parent=11 // pred_check_branch
        %273 = sbr.rel (%p271) target = $region28
      $region27: #{diffwave3d_block.1} parent=11 // pred_region
        _
      $region28: #{diffwave3d_block.1} parent=11 // pred_fallthru
        _
    $region12: #{diffwave3d_block.1} parent=5 // pred_fallthru
      _
    %p274 = scmp.lt.s32.totalorder %s15, 4
    // Predicated region
    $region29: #{diffwave3d_block.1} parent=5 // pred_check
      %p275 = pneg %p274
    $region30: #{diffwave3d_block.1} parent=5 // pred_check_branch
      %277 = sbr.rel (%p275) target = $region32
    $region31: #{diffwave3d_block.1} parent=5 // pred_region
      // Predicated region
      $region33: #{diffwave3d_block.1} parent=31 // pred_check
        %p278 = pneg %p47
      $region34: #{diffwave3d_block.1} parent=31 // pred_check_branch
        %280 = sbr.rel (%p278) target = $region36
      $region35: #{diffwave3d_block.1} parent=31 // pred_region
        %p281 = scmp.lt.s32.totalorder %s22, 1
        %s282 = scalar_select %p281, %s22, 1
        %s283 = smul.addr %s282, 14
        %s284 = smul.addr %s283, 8
        %s285 = scalar_lea.vmem %s0, %s284
      $region36: #{diffwave3d_block.1} parent=31 // pred_fallthru
        _
      // Predicated region
      $region37: #{diffwave3d_block.1} parent=31 // pred_check
        %p286 = pneg %p73
      $region38: #{diffwave3d_block.1} parent=31 // pred_check_branch
        %288 = sbr.rel (%p286) target = $region40
      $region39: #{diffwave3d_block.1} parent=31 // pred_region
        %p289 = scmp.lt.s32.totalorder %s22, 1
        %s290 = scalar_select %p289, %s22, 1
        %s291 = smul.addr %s290, 8
        %s292 = scalar_lea.vmem %s1, %s291
      $region40: #{diffwave3d_block.1} parent=31 // pred_fallthru
        _
      // Predicated region
      $region41: #{diffwave3d_block.1} parent=31 // pred_check
        %p293 = pneg %p101
      $region42: #{diffwave3d_block.1} parent=31 // pred_check_branch
        %295 = sbr.rel (%p293) target = $region44
      $region43: #{diffwave3d_block.1} parent=31 // pred_region
        %s296 = smul.u32 4, %s23
        %p297 = scmp.lt.s32.totalorder %s22, 1
        %s298 = scalar_select %p297, %s22, 1
        %p299 = scmp.lt.s32.totalorder %s296, 7
        %s300 = scalar_select %p299, %s296, 7
        %s301 = smul.addr %s298, 8
        %s302 = sadd.s32 %s300, %s301
        %s303 = smul.addr %s302, 8
        %s304 = scalar_lea.vmem %s2, %s303
        %s305 = smul.u32 4, %s23
      $region44: #{diffwave3d_block.1} parent=31 // pred_fallthru
        _
    $region32: #{diffwave3d_block.1} parent=5 // pred_fallthru
      _
    %p306 = scmp.le.s32.totalorder 1, %s15
    %p307 = scmp.lt.s32.totalorder %s15, 5
    %p308 = pnand %p306, %p307
    %p309 = pneg %p308
    // Predicated region
    $region45: #{diffwave3d_block.1} parent=5 // pred_check
      _
    $region46: #{diffwave3d_block.1} parent=5 // pred_check_branch
      %311 = sbr.rel (%p308) target = $region48
    $region47: #{diffwave3d_block.1} parent=5 // pred_region
      %s312 = ssub.s32 %s15, 1
      %p313 = scmp.lt.s32.totalorder %s24, 1
      %s314 = scalar_select %p313, %s24, 1
      %s315 = smul.addr %s314, 14
      %s316 = smul.addr %s315, 8
      %s317 = scalar_lea.vmem %s0, %s316
      %p318 = pneg %p53
      %p319 = pneg %p50
      %p320 = scmp.lt.s32.totalorder %s24, 1
      %s321 = scalar_select %p320, %s24, 1
      %s322 = smul.addr %s321, 8
      %s323 = scalar_lea.vmem %s1, %s322
      %p324 = pneg %p79
      %p325 = pneg %p76
      %s326 = smul.u32 4, %s25
      %p327 = scmp.lt.s32.totalorder %s24, 1
      %s328 = scalar_select %p327, %s24, 1
      %p329 = scmp.lt.s32.totalorder %s326, 7
      %s330 = scalar_select %p329, %s326, 7
      %s331 = smul.addr %s328, 8
      %s332 = sadd.s32 %s330, %s331
      %s333 = smul.addr %s332, 8
      %s334 = scalar_lea.vmem %s2, %s333
      %p335 = pneg %p107
      %p336 = pneg %p104
      %p337 = pneg %p128
      %p338 = pneg %p125
      %p339 = pneg %p149
      %p340 = pneg %p146
      %p341 = pneg %p170
      %p342 = pneg %p167
      %p343 = pneg %p191
      %p344 = pneg %p188
      %p345 = pneg %p219
      %p346 = pneg %p216
      %s347 = smul.u32 4, %s25
      %p348 = scmp.lt.s32.totalorder %s24, 1
      %s349 = scalar_select %p348, %s24, 1
      %p350 = scmp.lt.s32.totalorder %s347, 7
      %s351 = scalar_select %p350, %s347, 7
      %s352 = smul.addr %s349, 8
      %s353 = sadd.s32 %s351, %s352
      %s354 = smul.addr %s353, 8
      %s355 = scalar_lea.vmem %s7, %s354
      %p356 = pneg %p247
      %p357 = pneg %p244
      %s358 = smul.u32 4, %s25
      %p359 = scmp.lt.s32.totalorder %s24, 1
      %s360 = scalar_select %p359, %s24, 1
      %p361 = scmp.lt.s32.totalorder %s358, 7
      %s362 = scalar_select %p361, %s358, 7
      %s363 = smul.addr %s360, 8
      %s364 = sadd.s32 %s362, %s363
      %s365 = smul.addr %s364, 8
      %s366 = scalar_lea.vmem %s8, %s365
      %p367 = scmp.lt.s32.totalorder %s24, 1
      %s368 = scalar_select %p367, %s24, 1
      %s369 = smul.addr %s368, 14
      %s370 = smul.addr %s369, 8
      %s371 = scalar_lea.vmem %s0, %s370
      %p372 = scmp.lt.s32.totalorder %s24, 1
      %s373 = scalar_select %p372, %s24, 1
      %s374 = smul.addr %s373, 8
      %s375 = scalar_lea.vmem %s1, %s374
      %s376 = smul.u32 4, %s25
      %p377 = scmp.lt.s32.totalorder %s24, 1
      %s378 = scalar_select %p377, %s24, 1
      %p379 = scmp.lt.s32.totalorder %s376, 7
      %s380 = scalar_select %p379, %s376, 7
      %s381 = smul.addr %s378, 8
      %s382 = sadd.s32 %s380, %s381
      %s383 = smul.addr %s382, 8
      %s384 = scalar_lea.vmem %s2, %s383
      %s385 = smul.u32 4, %s25
      %s386 = smul.u32 4, %s25
      %p387 = scmp.lt.s32.totalorder %s24, 1
      %s388 = scalar_select %p387, %s24, 1
      %p389 = scmp.lt.s32.totalorder %s386, 7
      %s390 = scalar_select %p389, %s386, 7
      %s391 = smul.addr %s388, 8
      %s392 = sadd.s32 %s390, %s391
      %s393 = smul.addr %s392, 8
      %s394 = scalar_lea.vmem %s7, %s393
      %s395 = smul.u32 4, %s25
      %s396 = smul.u32 4, %s25
      %p397 = scmp.lt.s32.totalorder %s24, 1
      %s398 = scalar_select %p397, %s24, 1
      %p399 = scmp.lt.s32.totalorder %s396, 7
      %s400 = scalar_select %p399, %s396, 7
      %s401 = smul.addr %s398, 8
      %s402 = sadd.s32 %s400, %s401
      %s403 = smul.addr %s402, 8
      %s404 = scalar_lea.vmem %s8, %s403
      %s405 = smul.u32 4, %s25
      %s408 = smul.u32 %s25, 512
      %v409 = vld [vmem:[%s375] sm:$0xff]
      %s410 = sshra.s32 %s408, 7
      %s411 = sand.u32 %s408, 127
      %s412 = smul.addr %s410, 8
      %s413 = scalar_lea.vmem %s371, %s412
      %v414 = vld [vmem:[%s413] sm:$0xff]
      %v415 = vld [vmem:[%s413 + $0x8] sm:$0xff]
      %v416 = vld [vmem:[%s413 + $0x10] sm:$0xff]
      %v417 = vld [vmem:[%s413 + $0x18] sm:$0xff]
      %v418 = vld [vmem:[%s413 + $0x20] sm:$0xff]
      %v419 = vld [vmem:[%s413 + $0x28] sm:$0xff]
      %v420 = vld [vmem:[%s413 + $0x30] sm:$0xff]
      %v421 = vld [vmem:[%s413 + $0x38] sm:$0xff]
      %v422 = vld [vmem:[%s413 + $0x40] sm:$0xff]
      %v423 = vld [vmem:[%s413 + $0x48] sm:$0xff]
      %425 = vset.pattern.permute.xlu0 0
      %426 = vperm.xlu0 %425, %v409
      %v427 = vpop.permute.xlu0 %426
      %v429 = vadd.f32 %v414, %v427
      %v430 = vadd.f32 %v415, %v427
      %v431 = vadd.f32 %v416, %v427
      %v432 = vadd.f32 %v417, %v427
      %v433 = vadd.f32 %v418, %v427
      %v434 = vadd.f32 %v419, %v427
      %v435 = vadd.f32 %v420, %v427
      %v436 = vadd.f32 %v421, %v427
      %v437 = vadd.f32 %v422, %v427
      %v438 = vadd.f32 %v423, %v427
      %439 = vst [vmem:[#allocation2] sm:$0xff] %v429
      %440 = vst [vmem:[#allocation2 + $0x8] sm:$0xff] %v430
      %441 = vst [vmem:[#allocation2 + $0x10] sm:$0xff] %v431
      %442 = vst [vmem:[#allocation2 + $0x18] sm:$0xff] %v432
      %443 = vst [vmem:[#allocation2 + $0x20] sm:$0xff] %v433
      %444 = vst [vmem:[#allocation2 + $0x28] sm:$0xff] %v434
      %445 = vst [vmem:[#allocation2 + $0x30] sm:$0xff] %v435
      %446 = vst [vmem:[#allocation2 + $0x38] sm:$0xff] %v436
      %447 = vst [vmem:[#allocation2 + $0x40] sm:$0xff] %v437
      %448 = vst [vmem:[#allocation2 + $0x48] sm:$0xff] %v438
      %v449 = vld [vmem:[%s3] ss:$8 sm:$0xf]
      %vm450 = vcmp.ne.f32.partialorder %v449, 0.0
      %v451 = vld [vmem:[#allocation2] sm:$0xff]
      %v452 = vld [vmem:[#allocation2 + $0x8] sm:$0xff]
      %v453 = vld [vmem:[#allocation2 + $0x10] sm:$0xff]
      %v454 = vld [vmem:[#allocation2 + $0x18] sm:$0xff]
      %v455 = vld [vmem:[#allocation2 + $0x20] sm:$0xff]
      %v456 = vsel %vm450, 1, 0
      %v457 = vlaneseq
      %v458 = vshrl.u32 %v457, 7
      %v459 = vsub.s32 0, %v458
      %v460 = vrot.slane %v456, %v459
      %v461 = vlaneseq
      %v462 = vshrl.u32 %v461, 7
      %v463 = vsub.s32 1, %v462
      %v464 = vrot.slane %v456, %v463
      %v465 = vlaneseq
      %v466 = vshrl.u32 %v465, 7
      %v467 = vsub.s32 2, %v466
      %v468 = vrot.slane %v456, %v467
      %v469 = vlaneseq
      %v470 = vshrl.u32 %v469, 7
      %v471 = vsub.s32 3, %v470
      %v472 = vrot.slane %v456, %v471
      %vm473 = vcmp.eq.s32.totalorder %v460, 1
      %vm474 = vcmp.eq.s32.totalorder %v464, 1
      %vm475 = vcmp.eq.s32.totalorder %v468, 1
      %vm476 = vcmp.eq.s32.totalorder %v472, 1
      %482 = vrot.lane.b32.xlu0 %v451, 17
      %v483 = vpop.permute.xlu0 %482
      %484 = vrot.lane.b32.xlu0 %v452, 17
      %v485 = vpop.permute.xlu0 %484
      %486 = vrot.lane.b32.xlu0 %v453, 17
      %v487 = vpop.permute.xlu0 %486
      %488 = vrot.lane.b32.xlu0 %v454, 17
      %v489 = vpop.permute.xlu0 %488
      %490 = vrot.lane.b32.xlu0 %v455, 17
      %v491 = vpop.permute.xlu0 %490
      %vm492 = vcmask 138240
      %v493 = vsel %vm492, %v483, %v485
      %v494 = vsel %vm492, %v485, %v487
      %v495 = vsel %vm492, %v487, %v489
      %v496 = vsel %vm492, %v489, %v491
      %v501 = vsel %vm473, %v493, 0.0
      %v502 = vsel %vm474, %v494, 0.0
      %v503 = vsel %vm475, %v495, 0.0
      %v504 = vsel %vm476, %v496, 0.0
      %v505 = vpack.c.bf16 %v501, %v501
      %v506 = vpack.c.bf16 %v502, %v502
      %v507 = vpack.c.bf16 %v503, %v503
      %v508 = vpack.c.bf16 %v504, %v504
      %v513 = vunpack.c.l.b16 %v505
      %v514 = vunpack.c.l.b16 %v506
      %v515 = vunpack.c.l.b16 %v507
      %v516 = vunpack.c.l.b16 %v508
      %v517 = vpack.c.b16 %v514, %v513
      %v518 = vpack.c.b16 %v516, %v515
      %521 = vst [vmem:[#allocation3] sm:$0xff] %v517
      %522 = vst [vmem:[#allocation3 + $0x8] sm:$0xff] %v518
      %v523 = vld [vmem:[#allocation2 + $0x10] sm:$0xff]
      %v524 = vld [vmem:[#allocation2 + $0x18] sm:$0xff]
      %v525 = vld [vmem:[#allocation2 + $0x20] sm:$0xff]
      %v526 = vld [vmem:[#allocation2 + $0x28] sm:$0xff]
      %v527 = vld [vmem:[#allocation2 + $0x30] sm:$0xff]
      %533 = vrot.lane.b32.xlu0 %v523, 17
      %v534 = vpop.permute.xlu0 %533
      %535 = vrot.lane.b32.xlu0 %v524, 17
      %v536 = vpop.permute.xlu0 %535
      %537 = vrot.lane.b32.xlu0 %v525, 17
      %v538 = vpop.permute.xlu0 %537
      %539 = vrot.lane.b32.xlu0 %v526, 17
      %v540 = vpop.permute.xlu0 %539
      %541 = vrot.lane.b32.xlu0 %v527, 17
      %v542 = vpop.permute.xlu0 %541
      %v543 = vsel %vm492, %v534, %v536
      %v544 = vsel %vm492, %v536, %v538
      %v545 = vsel %vm492, %v538, %v540
      %v546 = vsel %vm492, %v540, %v542
      %v551 = vsel %vm473, %v543, 0.0
      %v552 = vsel %vm474, %v544, 0.0
      %v553 = vsel %vm475, %v545, 0.0
      %v554 = vsel %vm476, %v546, 0.0
      %v555 = vpack.c.bf16 %v551, %v551
      %v556 = vpack.c.bf16 %v552, %v552
      %v557 = vpack.c.bf16 %v553, %v553
      %v558 = vpack.c.bf16 %v554, %v554
      %v563 = vunpack.c.l.b16 %v555
      %v564 = vunpack.c.l.b16 %v556
      %v565 = vunpack.c.l.b16 %v557
      %v566 = vunpack.c.l.b16 %v558
      %v567 = vpack.c.b16 %v564, %v563
      %v568 = vpack.c.b16 %v566, %v565
      %571 = vst [vmem:[#allocation3 + $0x90] sm:$0xff] %v567
      %572 = vst [vmem:[#allocation3 + $0x98] sm:$0xff] %v568
      %v573 = vld [vmem:[#allocation2 + $0x20] sm:$0xff]
      %v574 = vld [vmem:[#allocation2 + $0x28] sm:$0xff]
      %v575 = vld [vmem:[#allocation2 + $0x30] sm:$0xff]
      %v576 = vld [vmem:[#allocation2 + $0x38] sm:$0xff]
      %v577 = vld [vmem:[#allocation2 + $0x40] sm:$0xff]
      %583 = vrot.lane.b32.xlu0 %v573, 17
      %v584 = vpop.permute.xlu0 %583
      %585 = vrot.lane.b32.xlu0 %v574, 17
      %v586 = vpop.permute.xlu0 %585
      %587 = vrot.lane.b32.xlu0 %v575, 17
      %v588 = vpop.permute.xlu0 %587
      %589 = vrot.lane.b32.xlu0 %v576, 17
      %v590 = vpop.permute.xlu0 %589
      %591 = vrot.lane.b32.xlu0 %v577, 17
      %v592 = vpop.permute.xlu0 %591
      %v593 = vsel %vm492, %v584, %v586
      %v594 = vsel %vm492, %v586, %v588
      %v595 = vsel %vm492, %v588, %v590
      %v596 = vsel %vm492, %v590, %v592
      %v601 = vsel %vm473, %v593, 0.0
      %v602 = vsel %vm474, %v594, 0.0
      %v603 = vsel %vm475, %v595, 0.0
      %v604 = vsel %vm476, %v596, 0.0
      %v605 = vpack.c.bf16 %v601, %v601
      %v606 = vpack.c.bf16 %v602, %v602
      %v607 = vpack.c.bf16 %v603, %v603
      %v608 = vpack.c.bf16 %v604, %v604
      %v613 = vunpack.c.l.b16 %v605
      %v614 = vunpack.c.l.b16 %v606
      %v615 = vunpack.c.l.b16 %v607
      %v616 = vunpack.c.l.b16 %v608
      %v617 = vpack.c.b16 %v614, %v613
      %v618 = vpack.c.b16 %v616, %v615
      %621 = vst [vmem:[#allocation3 + $0x120] sm:$0xff] %v617
      %622 = vst [vmem:[#allocation3 + $0x128] sm:$0xff] %v618
      %s623 = scalar_lea.vmem %s3, 1
      %v624 = vld [vmem:[%s623] ss:$8 sm:$0xf]
      %vm625 = vcmp.ne.f32.partialorder %v624, 0.0
      %v626 = vld [vmem:[#allocation2] sm:$0xff]
      %v627 = vld [vmem:[#allocation2 + $0x8] sm:$0xff]
      %v628 = vld [vmem:[#allocation2 + $0x10] sm:$0xff]
      %v629 = vld [vmem:[#allocation2 + $0x18] sm:$0xff]
      %v630 = vld [vmem:[#allocation2 + $0x20] sm:$0xff]
      %v631 = vsel %vm625, 1, 0
      %v632 = vlaneseq
      %v633 = vshrl.u32 %v632, 7
      %v634 = vsub.s32 0, %v633
      %v635 = vrot.slane %v631, %v634
      %v636 = vlaneseq
      %v637 = vshrl.u32 %v636, 7
      %v638 = vsub.s32 1, %v637
      %v639 = vrot.slane %v631, %v638
      %v640 = vlaneseq
      %v641 = vshrl.u32 %v640, 7
      %v642 = vsub.s32 2, %v641
      %v643 = vrot.slane %v631, %v642
      %v644 = vlaneseq
      %v645 = vshrl.u32 %v644, 7
      %v646 = vsub.s32 3, %v645
      %v647 = vrot.slane %v631, %v646
      %vm648 = vcmp.eq.s32.totalorder %v635, 1
      %vm649 = vcmp.eq.s32.totalorder %v639, 1
      %vm650 = vcmp.eq.s32.totalorder %v643, 1
      %vm651 = vcmp.eq.s32.totalorder %v647, 1
      %657 = vrot.lane.b32.xlu0 %v626, 16
      %v658 = vpop.permute.xlu0 %657
      %659 = vrot.lane.b32.xlu0 %v627, 16
      %v660 = vpop.permute.xlu0 %659
      %661 = vrot.lane.b32.xlu0 %v628, 16
      %v662 = vpop.permute.xlu0 %661
      %663 = vrot.lane.b32.xlu0 %v629, 16
      %v664 = vpop.permute.xlu0 %663
      %665 = vrot.lane.b32.xlu0 %v630, 16
      %v666 = vpop.permute.xlu0 %665
      %vm667 = vcmask 130048
      %v668 = vsel %vm667, %v658, %v660
      %v669 = vsel %vm667, %v660, %v662
      %v670 = vsel %vm667, %v662, %v664
      %v671 = vsel %vm667, %v664, %v666
      %v676 = vsel %vm648, %v668, 0.0
      %v677 = vsel %vm649, %v669, 0.0
      %v678 = vsel %vm650, %v670, 0.0
      %v679 = vsel %vm651, %v671, 0.0
      %v680 = vpack.c.bf16 %v676, %v676
      %v681 = vpack.c.bf16 %v677, %v677
      %v682 = vpack.c.bf16 %v678, %v678
      %v683 = vpack.c.bf16 %v679, %v679
      %v688 = vunpack.c.l.b16 %v680
      %v689 = vunpack.c.l.b16 %v681
      %v690 = vunpack.c.l.b16 %v682
      %v691 = vunpack.c.l.b16 %v683
      %v692 = vpack.c.b16 %v689, %v688
      %v693 = vpack.c.b16 %v691, %v690
      %696 = vst [vmem:[#allocation3 + $0x10] sm:$0xff] %v692
      %697 = vst [vmem:[#allocation3 + $0x18] sm:$0xff] %v693
      %v698 = vld [vmem:[#allocation2 + $0x10] sm:$0xff]
      %v699 = vld [vmem:[#allocation2 + $0x18] sm:$0xff]
      %v700 = vld [vmem:[#allocation2 + $0x20] sm:$0xff]
      %v701 = vld [vmem:[#allocation2 + $0x28] sm:$0xff]
      %v702 = vld [vmem:[#allocation2 + $0x30] sm:$0xff]
      %708 = vrot.lane.b32.xlu0 %v698, 16
      %v709 = vpop.permute.xlu0 %708
      %710 = vrot.lane.b32.xlu0 %v699, 16
      %v711 = vpop.permute.xlu0 %710
      %712 = vrot.lane.b32.xlu0 %v700, 16
      %v713 = vpop.permute.xlu0 %712
      %714 = vrot.lane.b32.xlu0 %v701, 16
      %v715 = vpop.permute.xlu0 %714
      %716 = vrot.lane.b32.xlu0 %v702, 16
      %v717 = vpop.permute.xlu0 %716
      %v718 = vsel %vm667, %v709, %v711
      %v719 = vsel %vm667, %v711, %v713
      %v720 = vsel %vm667, %v713, %v715
      %v721 = vsel %vm667, %v715, %v717
      %v726 = vsel %vm648, %v718, 0.0
      %v727 = vsel %vm649, %v719, 0.0
      %v728 = vsel %vm650, %v720, 0.0
      %v729 = vsel %vm651, %v721, 0.0
      %v730 = vpack.c.bf16 %v726, %v726
      %v731 = vpack.c.bf16 %v727, %v727
      %v732 = vpack.c.bf16 %v728, %v728
      %v733 = vpack.c.bf16 %v729, %v729
      %v738 = vunpack.c.l.b16 %v730
      %v739 = vunpack.c.l.b16 %v731
      %v740 = vunpack.c.l.b16 %v732
      %v741 = vunpack.c.l.b16 %v733
      %v742 = vpack.c.b16 %v739, %v738
      %v743 = vpack.c.b16 %v741, %v740
      %746 = vst [vmem:[#allocation3 + $0xa0] sm:$0xff] %v742
      %747 = vst [vmem:[#allocation3 + $0xa8] sm:$0xff] %v743
      %v748 = vld [vmem:[#allocation2 + $0x20] sm:$0xff]
      %v749 = vld [vmem:[#allocation2 + $0x28] sm:$0xff]
      %v750 = vld [vmem:[#allocation2 + $0x30] sm:$0xff]
      %v751 = vld [vmem:[#allocation2 + $0x38] sm:$0xff]
      %v752 = vld [vmem:[#allocation2 + $0x40] sm:$0xff]
      %758 = vrot.lane.b32.xlu0 %v748, 16
      %v759 = vpop.permute.xlu0 %758
      %760 = vrot.lane.b32.xlu0 %v749, 16
      %v761 = vpop.permute.xlu0 %760
      %762 = vrot.lane.b32.xlu0 %v750, 16
      %v763 = vpop.permute.xlu0 %762
      %764 = vrot.lane.b32.xlu0 %v751, 16
      %v765 = vpop.permute.xlu0 %764
      %766 = vrot.lane.b32.xlu0 %v752, 16
      %v767 = vpop.permute.xlu0 %766
      %v768 = vsel %vm667, %v759, %v761
      %v769 = vsel %vm667, %v761, %v763
      %v770 = vsel %vm667, %v763, %v765
      %v771 = vsel %vm667, %v765, %v767
      %v776 = vsel %vm648, %v768, 0.0
      %v777 = vsel %vm649, %v769, 0.0
      %v778 = vsel %vm650, %v770, 0.0
      %v779 = vsel %vm651, %v771, 0.0
      %v780 = vpack.c.bf16 %v776, %v776
      %v781 = vpack.c.bf16 %v777, %v777
      %v782 = vpack.c.bf16 %v778, %v778
      %v783 = vpack.c.bf16 %v779, %v779
      %v788 = vunpack.c.l.b16 %v780
      %v789 = vunpack.c.l.b16 %v781
      %v790 = vunpack.c.l.b16 %v782
      %v791 = vunpack.c.l.b16 %v783
      %v792 = vpack.c.b16 %v789, %v788
      %v793 = vpack.c.b16 %v791, %v790
      %796 = vst [vmem:[#allocation3 + $0x130] sm:$0xff] %v792
      %797 = vst [vmem:[#allocation3 + $0x138] sm:$0xff] %v793
      %s798 = scalar_lea.vmem %s3, 2
      %v799 = vld [vmem:[%s798] ss:$8 sm:$0xf]
      %vm800 = vcmp.ne.f32.partialorder %v799, 0.0
      %v801 = vld [vmem:[#allocation2] sm:$0xff]
      %v802 = vld [vmem:[#allocation2 + $0x8] sm:$0xff]
      %v803 = vld [vmem:[#allocation2 + $0x10] sm:$0xff]
      %v804 = vld [vmem:[#allocation2 + $0x18] sm:$0xff]
      %v805 = vld [vmem:[#allocation2 + $0x20] sm:$0xff]
      %v806 = vsel %vm800, 1, 0
      %v807 = vlaneseq
      %v808 = vshrl.u32 %v807, 7
      %v809 = vsub.s32 0, %v808
      %v810 = vrot.slane %v806, %v809
      %v811 = vlaneseq
      %v812 = vshrl.u32 %v811, 7
      %v813 = vsub.s32 1, %v812
      %v814 = vrot.slane %v806, %v813
      %v815 = vlaneseq
      %v816 = vshrl.u32 %v815, 7
      %v817 = vsub.s32 2, %v816
      %v818 = vrot.slane %v806, %v817
      %v819 = vlaneseq
      %v820 = vshrl.u32 %v819, 7
      %v821 = vsub.s32 3, %v820
      %v822 = vrot.slane %v806, %v821
      %vm823 = vcmp.eq.s32.totalorder %v810, 1
      %vm824 = vcmp.eq.s32.totalorder %v814, 1
      %vm825 = vcmp.eq.s32.totalorder %v818, 1
      %vm826 = vcmp.eq.s32.totalorder %v822, 1
      %832 = vrot.lane.b32.xlu0 %v801, 15
      %v833 = vpop.permute.xlu0 %832
      %834 = vrot.lane.b32.xlu0 %v802, 15
      %v835 = vpop.permute.xlu0 %834
      %836 = vrot.lane.b32.xlu0 %v803, 15
      %v837 = vpop.permute.xlu0 %836
      %838 = vrot.lane.b32.xlu0 %v804, 15
      %v839 = vpop.permute.xlu0 %838
      %840 = vrot.lane.b32.xlu0 %v805, 15
      %v841 = vpop.permute.xlu0 %840
      %vm842 = vcmask 121856
      %v843 = vsel %vm842, %v833, %v835
      %v844 = vsel %vm842, %v835, %v837
      %v845 = vsel %vm842, %v837, %v839
      %v846 = vsel %vm842, %v839, %v841
      %v851 = vsel %vm823, %v843, 0.0
      %v852 = vsel %vm824, %v844, 0.0
      %v853 = vsel %vm825, %v845, 0.0
      %v854 = vsel %vm826, %v846, 0.0
      %v855 = vpack.c.bf16 %v851, %v851
      %v856 = vpack.c.bf16 %v852, %v852
      %v857 = vpack.c.bf16 %v853, %v853
      %v858 = vpack.c.bf16 %v854, %v854
      %v863 = vunpack.c.l.b16 %v855
      %v864 = vunpack.c.l.b16 %v856
      %v865 = vunpack.c.l.b16 %v857
      %v866 = vunpack.c.l.b16 %v858
      %v867 = vpack.c.b16 %v864, %v863
      %v868 = vpack.c.b16 %v866, %v865
      %871 = vst [vmem:[#allocation3 + $0x20] sm:$0xff] %v867
      %872 = vst [vmem:[#allocation3 + $0x28] sm:$0xff] %v868
      %v873 = vld [vmem:[#allocation2 + $0x10] sm:$0xff]
      %v874 = vld [vmem:[#allocation2 + $0x18] sm:$0xff]
      %v875 = vld [vmem:[#allocation2 + $0x20] sm:$0xff]
      %v876 = vld [vmem:[#allocation2 + $0x28] sm:$0xff]
      %v877 = vld [vmem:[#allocation2 + $0x30] sm:$0xff]
      %883 = vrot.lane.b32.xlu0 %v873, 15
      %v884 = vpop.permute.xlu0 %883
      %885 = vrot.lane.b32.xlu0 %v874, 15
      %v886 = vpop.permute.xlu0 %885
      %887 = vrot.lane.b32.xlu0 %v875, 15
      %v888 = vpop.permute.xlu0 %887
      %889 = vrot.lane.b32.xlu0 %v876, 15
      %v890 = vpop.permute.xlu0 %889
      %891 = vrot.lane.b32.xlu0 %v877, 15
      %v892 = vpop.permute.xlu0 %891
      %v893 = vsel %vm842, %v884, %v886
      %v894 = vsel %vm842, %v886, %v888
      %v895 = vsel %vm842, %v888, %v890
      %v896 = vsel %vm842, %v890, %v892
      %v901 = vsel %vm823, %v893, 0.0
      %v902 = vsel %vm824, %v894, 0.0
      %v903 = vsel %vm825, %v895, 0.0
      %v904 = vsel %vm826, %v896, 0.0
      %v905 = vpack.c.bf16 %v901, %v901
      %v906 = vpack.c.bf16 %v902, %v902
      %v907 = vpack.c.bf16 %v903, %v903
      %v908 = vpack.c.bf16 %v904, %v904
      %v913 = vunpack.c.l.b16 %v905
      %v914 = vunpack.c.l.b16 %v906
      %v915 = vunpack.c.l.b16 %v907
      %v916 = vunpack.c.l.b16 %v908
      %v917 = vpack.c.b16 %v914, %v913
      %v918 = vpack.c.b16 %v916, %v915
      %921 = vst [vmem:[#allocation3 + $0xb0] sm:$0xff] %v917
      %922 = vst [vmem:[#allocation3 + $0xb8] sm:$0xff] %v918
      %v923 = vld [vmem:[#allocation2 + $0x20] sm:$0xff]
      %v924 = vld [vmem:[#allocation2 + $0x28] sm:$0xff]
      %v925 = vld [vmem:[#allocation2 + $0x30] sm:$0xff]
      %v926 = vld [vmem:[#allocation2 + $0x38] sm:$0xff]
      %v927 = vld [vmem:[#allocation2 + $0x40] sm:$0xff]
      %933 = vrot.lane.b32.xlu0 %v923, 15
      %v934 = vpop.permute.xlu0 %933
      %935 = vrot.lane.b32.xlu0 %v924, 15
      %v936 = vpop.permute.xlu0 %935
      %937 = vrot.lane.b32.xlu0 %v925, 15
      %v938 = vpop.permute.xlu0 %937
      %939 = vrot.lane.b32.xlu0 %v926, 15
      %v940 = vpop.permute.xlu0 %939
      %941 = vrot.lane.b32.xlu0 %v927, 15
      %v942 = vpop.permute.xlu0 %941
      %v943 = vsel %vm842, %v934, %v936
      %v944 = vsel %vm842, %v936, %v938
      %v945 = vsel %vm842, %v938, %v940
      %v946 = vsel %vm842, %v940, %v942
      %v951 = vsel %vm823, %v943, 0.0
      %v952 = vsel %vm824, %v944, 0.0
      %v953 = vsel %vm825, %v945, 0.0
      %v954 = vsel %vm826, %v946, 0.0
      %v955 = vpack.c.bf16 %v951, %v951
      %v956 = vpack.c.bf16 %v952, %v952
      %v957 = vpack.c.bf16 %v953, %v953
      %v958 = vpack.c.bf16 %v954, %v954
      %v963 = vunpack.c.l.b16 %v955
      %v964 = vunpack.c.l.b16 %v956
      %v965 = vunpack.c.l.b16 %v957
      %v966 = vunpack.c.l.b16 %v958
      %v967 = vpack.c.b16 %v964, %v963
      %v968 = vpack.c.b16 %v966, %v965
      %971 = vst [vmem:[#allocation3 + $0x140] sm:$0xff] %v967
      %972 = vst [vmem:[#allocation3 + $0x148] sm:$0xff] %v968
      %s973 = scalar_lea.vmem %s3, 3
      %v974 = vld [vmem:[%s973] ss:$8 sm:$0xf]
      %vm975 = vcmp.ne.f32.partialorder %v974, 0.0
      %v976 = vld [vmem:[#allocation2] sm:$0xff]
      %v977 = vld [vmem:[#allocation2 + $0x8] sm:$0xff]
      %v978 = vld [vmem:[#allocation2 + $0x10] sm:$0xff]
      %v979 = vld [vmem:[#allocation2 + $0x18] sm:$0xff]
      %v980 = vld [vmem:[#allocation2 + $0x20] sm:$0xff]
      %v981 = vsel %vm975, 1, 0
      %v982 = vlaneseq
      %v983 = vshrl.u32 %v982, 7
      %v984 = vsub.s32 0, %v983
      %v985 = vrot.slane %v981, %v984
      %v986 = vlaneseq
      %v987 = vshrl.u32 %v986, 7
      %v988 = vsub.s32 1, %v987
      %v989 = vrot.slane %v981, %v988
      %v990 = vlaneseq
      %v991 = vshrl.u32 %v990, 7
      %v992 = vsub.s32 2, %v991
      %v993 = vrot.slane %v981, %v992
      %v994 = vlaneseq
      %v995 = vshrl.u32 %v994, 7
      %v996 = vsub.s32 3, %v995
      %v997 = vrot.slane %v981, %v996
      %vm998 = vcmp.eq.s32.totalorder %v985, 1
      %vm999 = vcmp.eq.s32.totalorder %v989, 1
      %vm1000 = vcmp.eq.s32.totalorder %v993, 1
      %vm1001 = vcmp.eq.s32.totalorder %v997, 1
      %1007 = vrot.lane.b32.xlu0 %v976, 1
      %v1008 = vpop.permute.xlu0 %1007
      %1009 = vrot.lane.b32.xlu0 %v977, 1
      %v1010 = vpop.permute.xlu0 %1009
      %1011 = vrot.lane.b32.xlu0 %v978, 1
      %v1012 = vpop.permute.xlu0 %1011
      %1013 = vrot.lane.b32.xlu0 %v979, 1
      %v1014 = vpop.permute.xlu0 %1013
      %1015 = vrot.lane.b32.xlu0 %v980, 1
      %v1016 = vpop.permute.xlu0 %1015
      %vm1017 = vcmask 7168
      %v1018 = vsel %vm1017, %v1008, %v1010
      %v1019 = vsel %vm1017, %v1010, %v1012
      %v1020 = vsel %vm1017, %v1012, %v1014
      %v1021 = vsel %vm1017, %v1014, %v1016
      %v1026 = vsel %vm998, %v1018, 0.0
      %v1027 = vsel %vm999, %v1019, 0.0
      %v1028 = vsel %vm1000, %v1020, 0.0
      %v1029 = vsel %vm1001, %v1021, 0.0
      %v1030 = vpack.c.bf16 %v1026, %v1026
      %v1031 = vpack.c.bf16 %v1027, %v1027
      %v1032 = vpack.c.bf16 %v1028, %v1028
      %v1033 = vpack.c.bf16 %v1029, %v1029
      %v1038 = vunpack.c.l.b16 %v1030
      %v1039 = vunpack.c.l.b16 %v1031
      %v1040 = vunpack.c.l.b16 %v1032
      %v1041 = vunpack.c.l.b16 %v1033
      %v1042 = vpack.c.b16 %v1039, %v1038
      %v1043 = vpack.c.b16 %v1041, %v1040
      %1046 = vst [vmem:[#allocation3 + $0x30] sm:$0xff] %v1042
      %1047 = vst [vmem:[#allocation3 + $0x38] sm:$0xff] %v1043
      %v1048 = vld [vmem:[#allocation2 + $0x10] sm:$0xff]
      %v1049 = vld [vmem:[#allocation2 + $0x18] sm:$0xff]
      %v1050 = vld [vmem:[#allocation2 + $0x20] sm:$0xff]
      %v1051 = vld [vmem:[#allocation2 + $0x28] sm:$0xff]
      %v1052 = vld [vmem:[#allocation2 + $0x30] sm:$0xff]
      %1058 = vrot.lane.b32.xlu0 %v1048, 1
      %v1059 = vpop.permute.xlu0 %1058
      %1060 = vrot.lane.b32.xlu0 %v1049, 1
      %v1061 = vpop.permute.xlu0 %1060
      %1062 = vrot.lane.b32.xlu0 %v1050, 1
      %v1063 = vpop.permute.xlu0 %1062
      %1064 = vrot.lane.b32.xlu0 %v1051, 1
      %v1065 = vpop.permute.xlu0 %1064
      %1066 = vrot.lane.b32.xlu0 %v1052, 1
      %v1067 = vpop.permute.xlu0 %1066
      %v1068 = vsel %vm1017, %v1059, %v1061
      %v1069 = vsel %vm1017, %v1061, %v1063
      %v1070 = vsel %vm1017, %v1063, %v1065
      %v1071 = vsel %vm1017, %v1065, %v1067
      %v1076 = vsel %vm998, %v1068, 0.0
      %v1077 = vsel %vm999, %v1069, 0.0
      %v1078 = vsel %vm1000, %v1070, 0.0
      %v1079 = vsel %vm1001, %v1071, 0.0
      %v1080 = vpack.c.bf16 %v1076, %v1076
      %v1081 = vpack.c.bf16 %v1077, %v1077
      %v1082 = vpack.c.bf16 %v1078, %v1078
      %v1083 = vpack.c.bf16 %v1079, %v1079
      %v1088 = vunpack.c.l.b16 %v1080
      %v1089 = vunpack.c.l.b16 %v1081
      %v1090 = vunpack.c.l.b16 %v1082
      %v1091 = vunpack.c.l.b16 %v1083
      %v1092 = vpack.c.b16 %v1089, %v1088
      %v1093 = vpack.c.b16 %v1091, %v1090
      %1096 = vst [vmem:[#allocation3 + $0xc0] sm:$0xff] %v1092
      %1097 = vst [vmem:[#allocation3 + $0xc8] sm:$0xff] %v1093
      %v1098 = vld [vmem:[#allocation2 + $0x20] sm:$0xff]
      %v1099 = vld [vmem:[#allocation2 + $0x28] sm:$0xff]
      %v1100 = vld [vmem:[#allocation2 + $0x30] sm:$0xff]
      %v1101 = vld [vmem:[#allocation2 + $0x38] sm:$0xff]
      %v1102 = vld [vmem:[#allocation2 + $0x40] sm:$0xff]
      %1108 = vrot.lane.b32.xlu0 %v1098, 1
      %v1109 = vpop.permute.xlu0 %1108
      %1110 = vrot.lane.b32.xlu0 %v1099, 1
      %v1111 = vpop.permute.xlu0 %1110
      %1112 = vrot.lane.b32.xlu0 %v1100, 1
      %v1113 = vpop.permute.xlu0 %1112
      %1114 = vrot.lane.b32.xlu0 %v1101, 1
      %v1115 = vpop.permute.xlu0 %1114
      %1116 = vrot.lane.b32.xlu0 %v1102, 1
      %v1117 = vpop.permute.xlu0 %1116
      %v1118 = vsel %vm1017, %v1109, %v1111
      %v1119 = vsel %vm1017, %v1111, %v1113
      %v1120 = vsel %vm1017, %v1113, %v1115
      %v1121 = vsel %vm1017, %v1115, %v1117
      %v1126 = vsel %vm998, %v1118, 0.0
      %v1127 = vsel %vm999, %v1119, 0.0
      %v1128 = vsel %vm1000, %v1120, 0.0
      %v1129 = vsel %vm1001, %v1121, 0.0
      %v1130 = vpack.c.bf16 %v1126, %v1126
      %v1131 = vpack.c.bf16 %v1127, %v1127
      %v1132 = vpack.c.bf16 %v1128, %v1128
      %v1133 = vpack.c.bf16 %v1129, %v1129
      %v1138 = vunpack.c.l.b16 %v1130
      %v1139 = vunpack.c.l.b16 %v1131
      %v1140 = vunpack.c.l.b16 %v1132
      %v1141 = vunpack.c.l.b16 %v1133
      %v1142 = vpack.c.b16 %v1139, %v1138
      %v1143 = vpack.c.b16 %v1141, %v1140
      %1146 = vst [vmem:[#allocation3 + $0x150] sm:$0xff] %v1142
      %1147 = vst [vmem:[#allocation3 + $0x158] sm:$0xff] %v1143
      %v1148 = vld [vmem:[#allocation2 + $0x8] sm:$0xff]
      %v1149 = vld [vmem:[#allocation2 + $0x10] sm:$0xff]
      %v1150 = vld [vmem:[#allocation2 + $0x18] sm:$0xff]
      %v1151 = vld [vmem:[#allocation2 + $0x20] sm:$0xff]
      %v1152 = vpack.c.bf16 %v1148, %v1148
      %v1153 = vpack.c.bf16 %v1149, %v1149
      %v1154 = vpack.c.bf16 %v1150, %v1150
      %v1155 = vpack.c.bf16 %v1151, %v1151
      %v1160 = vunpack.c.l.b16 %v1152
      %v1161 = vunpack.c.l.b16 %v1153
      %v1162 = vunpack.c.l.b16 %v1154
      %v1163 = vunpack.c.l.b16 %v1155
      %v1164 = vpack.c.b16 %v1161, %v1160
      %v1165 = vpack.c.b16 %v1163, %v1162
      %1168 = vst [vmem:[#allocation3 + $0x40] sm:$0xff] %v1164
      %1169 = vst [vmem:[#allocation3 + $0x48] sm:$0xff] %v1165
      %v1170 = vld [vmem:[#allocation2 + $0x18] sm:$0xff]
      %v1171 = vld [vmem:[#allocation2 + $0x20] sm:$0xff]
      %v1172 = vld [vmem:[#allocation2 + $0x28] sm:$0xff]
      %v1173 = vld [vmem:[#allocation2 + $0x30] sm:$0xff]
      %v1174 = vpack.c.bf16 %v1170, %v1170
      %v1175 = vpack.c.bf16 %v1171, %v1171
      %v1176 = vpack.c.bf16 %v1172, %v1172
      %v1177 = vpack.c.bf16 %v1173, %v1173
      %v1182 = vunpack.c.l.b16 %v1174
      %v1183 = vunpack.c.l.b16 %v1175
      %v1184 = vunpack.c.l.b16 %v1176
      %v1185 = vunpack.c.l.b16 %v1177
      %v1186 = vpack.c.b16 %v1183, %v1182
      %v1187 = vpack.c.b16 %v1185, %v1184
      %1190 = vst [vmem:[#allocation3 + $0xd0] sm:$0xff] %v1186
      %1191 = vst [vmem:[#allocation3 + $0xd8] sm:$0xff] %v1187
      %v1192 = vld [vmem:[#allocation2 + $0x28] sm:$0xff]
      %v1193 = vld [vmem:[#allocation2 + $0x30] sm:$0xff]
      %v1194 = vld [vmem:[#allocation2 + $0x38] sm:$0xff]
      %v1195 = vld [vmem:[#allocation2 + $0x40] sm:$0xff]
      %v1196 = vpack.c.bf16 %v1192, %v1192
      %v1197 = vpack.c.bf16 %v1193, %v1193
      %v1198 = vpack.c.bf16 %v1194, %v1194
      %v1199 = vpack.c.bf16 %v1195, %v1195
      %v1204 = vunpack.c.l.b16 %v1196
      %v1205 = vunpack.c.l.b16 %v1197
      %v1206 = vunpack.c.l.b16 %v1198
      %v1207 = vunpack.c.l.b16 %v1199
      %v1208 = vpack.c.b16 %v1205, %v1204
      %v1209 = vpack.c.b16 %v1207, %v1206
      %1212 = vst [vmem:[#allocation3 + $0x160] sm:$0xff] %v1208
      %1213 = vst [vmem:[#allocation3 + $0x168] sm:$0xff] %v1209
      %s1214 = scalar_lea.vmem %s3, 5
      %v1215 = vld [vmem:[%s1214] ss:$8 sm:$0xf]
      %vm1216 = vcmp.ne.f32.partialorder %v1215, 0.0
      %v1217 = vld [vmem:[#allocation2 + $0x8] sm:$0xff]
      %v1218 = vld [vmem:[#allocation2 + $0x10] sm:$0xff]
      %v1219 = vld [vmem:[#allocation2 + $0x18] sm:$0xff]
      %v1220 = vld [vmem:[#allocation2 + $0x20] sm:$0xff]
      %v1221 = vld [vmem:[#allocation2 + $0x28] sm:$0xff]
      %v1222 = vsel %vm1216, 1, 0
      %v1223 = vlaneseq
      %v1224 = vshrl.u32 %v1223, 7
      %v1225 = vsub.s32 0, %v1224
      %v1226 = vrot.slane %v1222, %v1225
      %v1227 = vlaneseq
      %v1228 = vshrl.u32 %v1227, 7
      %v1229 = vsub.s32 1, %v1228
      %v1230 = vrot.slane %v1222, %v1229
      %v1231 = vlaneseq
      %v1232 = vshrl.u32 %v1231, 7
      %v1233 = vsub.s32 2, %v1232
      %v1234 = vrot.slane %v1222, %v1233
      %v1235 = vlaneseq
      %v1236 = vshrl.u32 %v1235, 7
      %v1237 = vsub.s32 3, %v1236
      %v1238 = vrot.slane %v1222, %v1237
      %vm1239 = vcmp.eq.s32.totalorder %v1226, 1
      %vm1240 = vcmp.eq.s32.totalorder %v1230, 1
      %vm1241 = vcmp.eq.s32.totalorder %v1234, 1
      %vm1242 = vcmp.eq.s32.totalorder %v1238, 1
      %1248 = vrot.lane.b32.xlu0 %v1217, 127
      %v1249 = vpop.permute.xlu0 %1248
      %1250 = vrot.lane.b32.xlu0 %v1218, 127
      %v1251 = vpop.permute.xlu0 %1250
      %1252 = vrot.lane.b32.xlu0 %v1219, 127
      %v1253 = vpop.permute.xlu0 %1252
      %1254 = vrot.lane.b32.xlu0 %v1220, 127
      %v1255 = vpop.permute.xlu0 %1254
      %1256 = vrot.lane.b32.xlu0 %v1221, 127
      %v1257 = vpop.permute.xlu0 %1256
      %vm1258 = vcmask 1039360
      %v1259 = vsel %vm1258, %v1249, %v1251
      %v1260 = vsel %vm1258, %v1251, %v1253
      %v1261 = vsel %vm1258, %v1253, %v1255
      %v1262 = vsel %vm1258, %v1255, %v1257
      %v1267 = vsel %vm1239, %v1259, 0.0
      %v1268 = vsel %vm1240, %v1260, 0.0
      %v1269 = vsel %vm1241, %v1261, 0.0
      %v1270 = vsel %vm1242, %v1262, 0.0
      %v1271 = vpack.c.bf16 %v1267, %v1267
      %v1272 = vpack.c.bf16 %v1268, %v1268
      %v1273 = vpack.c.bf16 %v1269, %v1269
      %v1274 = vpack.c.bf16 %v1270, %v1270
      %v1279 = vunpack.c.l.b16 %v1271
      %v1280 = vunpack.c.l.b16 %v1272
      %v1281 = vunpack.c.l.b16 %v1273
      %v1282 = vunpack.c.l.b16 %v1274
      %v1283 = vpack.c.b16 %v1280, %v1279
      %v1284 = vpack.c.b16 %v1282, %v1281
      %1287 = vst [vmem:[#allocation3 + $0x50] sm:$0xff] %v1283
      %1288 = vst [vmem:[#allocation3 + $0x58] sm:$0xff] %v1284
      %v1289 = vld [vmem:[#allocation2 + $0x18] sm:$0xff]
      %v1290 = vld [vmem:[#allocation2 + $0x20] sm:$0xff]
      %v1291 = vld [vmem:[#allocation2 + $0x28] sm:$0xff]
      %v1292 = vld [vmem:[#allocation2 + $0x30] sm:$0xff]
      %v1293 = vld [vmem:[#allocation2 + $0x38] sm:$0xff]
      %1299 = vrot.lane.b32.xlu0 %v1289, 127
      %v1300 = vpop.permute.xlu0 %1299
      %1301 = vrot.lane.b32.xlu0 %v1290, 127
      %v1302 = vpop.permute.xlu0 %1301
      %1303 = vrot.lane.b32.xlu0 %v1291, 127
      %v1304 = vpop.permute.xlu0 %1303
      %1305 = vrot.lane.b32.xlu0 %v1292, 127
      %v1306 = vpop.permute.xlu0 %1305
      %1307 = vrot.lane.b32.xlu0 %v1293, 127
      %v1308 = vpop.permute.xlu0 %1307
      %v1309 = vsel %vm1258, %v1300, %v1302
      %v1310 = vsel %vm1258, %v1302, %v1304
      %v1311 = vsel %vm1258, %v1304, %v1306
      %v1312 = vsel %vm1258, %v1306, %v1308
      %v1317 = vsel %vm1239, %v1309, 0.0
      %v1318 = vsel %vm1240, %v1310, 0.0
      %v1319 = vsel %vm1241, %v1311, 0.0
      %v1320 = vsel %vm1242, %v1312, 0.0
      %v1321 = vpack.c.bf16 %v1317, %v1317
      %v1322 = vpack.c.bf16 %v1318, %v1318
      %v1323 = vpack.c.bf16 %v1319, %v1319
      %v1324 = vpack.c.bf16 %v1320, %v1320
      %v1329 = vunpack.c.l.b16 %v1321
      %v1330 = vunpack.c.l.b16 %v1322
      %v1331 = vunpack.c.l.b16 %v1323
      %v1332 = vunpack.c.l.b16 %v1324
      %v1333 = vpack.c.b16 %v1330, %v1329
      %v1334 = vpack.c.b16 %v1332, %v1331
      %1337 = vst [vmem:[#allocation3 + $0xe0] sm:$0xff] %v1333
      %1338 = vst [vmem:[#allocation3 + $0xe8] sm:$0xff] %v1334
      %v1339 = vld [vmem:[#allocation2 + $0x28] sm:$0xff]
      %v1340 = vld [vmem:[#allocation2 + $0x30] sm:$0xff]
      %v1341 = vld [vmem:[#allocation2 + $0x38] sm:$0xff]
      %v1342 = vld [vmem:[#allocation2 + $0x40] sm:$0xff]
      %v1343 = vld [vmem:[#allocation2 + $0x48] sm:$0xff]
      %1349 = vrot.lane.b32.xlu0 %v1339, 127
      %v1350 = vpop.permute.xlu0 %1349
      %1351 = vrot.lane.b32.xlu0 %v1340, 127
      %v1352 = vpop.permute.xlu0 %1351
      %1353 = vrot.lane.b32.xlu0 %v1341, 127
      %v1354 = vpop.permute.xlu0 %1353
      %1355 = vrot.lane.b32.xlu0 %v1342, 127
      %v1356 = vpop.permute.xlu0 %1355
      %1357 = vrot.lane.b32.xlu0 %v1343, 127
      %v1358 = vpop.permute.xlu0 %1357
      %v1359 = vsel %vm1258, %v1350, %v1352
      %v1360 = vsel %vm1258, %v1352, %v1354
      %v1361 = vsel %vm1258, %v1354, %v1356
      %v1362 = vsel %vm1258, %v1356, %v1358
      %v1367 = vsel %vm1239, %v1359, 0.0
      %v1368 = vsel %vm1240, %v1360, 0.0
      %v1369 = vsel %vm1241, %v1361, 0.0
      %v1370 = vsel %vm1242, %v1362, 0.0
      %v1371 = vpack.c.bf16 %v1367, %v1367
      %v1372 = vpack.c.bf16 %v1368, %v1368
      %v1373 = vpack.c.bf16 %v1369, %v1369
      %v1374 = vpack.c.bf16 %v1370, %v1370
      %v1379 = vunpack.c.l.b16 %v1371
      %v1380 = vunpack.c.l.b16 %v1372
      %v1381 = vunpack.c.l.b16 %v1373
      %v1382 = vunpack.c.l.b16 %v1374
      %v1383 = vpack.c.b16 %v1380, %v1379
      %v1384 = vpack.c.b16 %v1382, %v1381
      %1387 = vst [vmem:[#allocation3 + $0x170] sm:$0xff] %v1383
      %1388 = vst [vmem:[#allocation3 + $0x178] sm:$0xff] %v1384
      %s1389 = scalar_lea.vmem %s3, 6
      %v1390 = vld [vmem:[%s1389] ss:$8 sm:$0xf]
      %vm1391 = vcmp.ne.f32.partialorder %v1390, 0.0
      %v1392 = vld [vmem:[#allocation2 + $0x8] sm:$0xff]
      %v1393 = vld [vmem:[#allocation2 + $0x10] sm:$0xff]
      %v1394 = vld [vmem:[#allocation2 + $0x18] sm:$0xff]
      %v1395 = vld [vmem:[#allocation2 + $0x20] sm:$0xff]
      %v1396 = vld [vmem:[#allocation2 + $0x28] sm:$0xff]
      %v1397 = vsel %vm1391, 1, 0
      %v1398 = vlaneseq
      %v1399 = vshrl.u32 %v1398, 7
      %v1400 = vsub.s32 0, %v1399
      %v1401 = vrot.slane %v1397, %v1400
      %v1402 = vlaneseq
      %v1403 = vshrl.u32 %v1402, 7
      %v1404 = vsub.s32 1, %v1403
      %v1405 = vrot.slane %v1397, %v1404
      %v1406 = vlaneseq
      %v1407 = vshrl.u32 %v1406, 7
      %v1408 = vsub.s32 2, %v1407
      %v1409 = vrot.slane %v1397, %v1408
      %v1410 = vlaneseq
      %v1411 = vshrl.u32 %v1410, 7
      %v1412 = vsub.s32 3, %v1411
      %v1413 = vrot.slane %v1397, %v1412
      %vm1414 = vcmp.eq.s32.totalorder %v1401, 1
      %vm1415 = vcmp.eq.s32.totalorder %v1405, 1
      %vm1416 = vcmp.eq.s32.totalorder %v1409, 1
      %vm1417 = vcmp.eq.s32.totalorder %v1413, 1
      %1423 = vrot.lane.b32.xlu0 %v1392, 113
      %v1424 = vpop.permute.xlu0 %1423
      %1425 = vrot.lane.b32.xlu0 %v1393, 113
      %v1426 = vpop.permute.xlu0 %1425
      %1427 = vrot.lane.b32.xlu0 %v1394, 113
      %v1428 = vpop.permute.xlu0 %1427
      %1429 = vrot.lane.b32.xlu0 %v1395, 113
      %v1430 = vpop.permute.xlu0 %1429
      %1431 = vrot.lane.b32.xlu0 %v1396, 113
      %v1432 = vpop.permute.xlu0 %1431
      %vm1433 = vcmask 924672
      %v1434 = vsel %vm1433, %v1424, %v1426
      %v1435 = vsel %vm1433, %v1426, %v1428
      %v1436 = vsel %vm1433, %v1428, %v1430
      %v1437 = vsel %vm1433, %v1430, %v1432
      %v1442 = vsel %vm1414, %v1434, 0.0
      %v1443 = vsel %vm1415, %v1435, 0.0
      %v1444 = vsel %vm1416, %v1436, 0.0
      %v1445 = vsel %vm1417, %v1437, 0.0
      %v1446 = vpack.c.bf16 %v1442, %v1442
      %v1447 = vpack.c.bf16 %v1443, %v1443
      %v1448 = vpack.c.bf16 %v1444, %v1444
      %v1449 = vpack.c.bf16 %v1445, %v1445
      %v1454 = vunpack.c.l.b16 %v1446
      %v1455 = vunpack.c.l.b16 %v1447
      %v1456 = vunpack.c.l.b16 %v1448
      %v1457 = vunpack.c.l.b16 %v1449
      %v1458 = vpack.c.b16 %v1455, %v1454
      %v1459 = vpack.c.b16 %v1457, %v1456
      %1462 = vst [vmem:[#allocation3 + $0x60] sm:$0xff] %v1458
      %1463 = vst [vmem:[#allocation3 + $0x68] sm:$0xff] %v1459
      %v1464 = vld [vmem:[#allocation2 + $0x18] sm:$0xff]
      %v1465 = vld [vmem:[#allocation2 + $0x20] sm:$0xff]
      %v1466 = vld [vmem:[#allocation2 + $0x28] sm:$0xff]
      %v1467 = vld [vmem:[#allocation2 + $0x30] sm:$0xff]
      %v1468 = vld [vmem:[#allocation2 + $0x38] sm:$0xff]
      %1474 = vrot.lane.b32.xlu0 %v1464, 113
      %v1475 = vpop.permute.xlu0 %1474
      %1476 = vrot.lane.b32.xlu0 %v1465, 113
      %v1477 = vpop.permute.xlu0 %1476
      %1478 = vrot.lane.b32.xlu0 %v1466, 113
      %v1479 = vpop.permute.xlu0 %1478
      %1480 = vrot.lane.b32.xlu0 %v1467, 113
      %v1481 = vpop.permute.xlu0 %1480
      %1482 = vrot.lane.b32.xlu0 %v1468, 113
      %v1483 = vpop.permute.xlu0 %1482
      %v1484 = vsel %vm1433, %v1475, %v1477
      %v1485 = vsel %vm1433, %v1477, %v1479
      %v1486 = vsel %vm1433, %v1479, %v1481
      %v1487 = vsel %vm1433, %v1481, %v1483
      %v1492 = vsel %vm1414, %v1484, 0.0
      %v1493 = vsel %vm1415, %v1485, 0.0
      %v1494 = vsel %vm1416, %v1486, 0.0
      %v1495 = vsel %vm1417, %v1487, 0.0
      %v1496 = vpack.c.bf16 %v1492, %v1492
      %v1497 = vpack.c.bf16 %v1493, %v1493
      %v1498 = vpack.c.bf16 %v1494, %v1494
      %v1499 = vpack.c.bf16 %v1495, %v1495
      %v1504 = vunpack.c.l.b16 %v1496
      %v1505 = vunpack.c.l.b16 %v1497
      %v1506 = vunpack.c.l.b16 %v1498
      %v1507 = vunpack.c.l.b16 %v1499
      %v1508 = vpack.c.b16 %v1505, %v1504
      %v1509 = vpack.c.b16 %v1507, %v1506
      %1512 = vst [vmem:[#allocation3 + $0xf0] sm:$0xff] %v1508
      %1513 = vst [vmem:[#allocation3 + $0xf8] sm:$0xff] %v1509
      %v1514 = vld [vmem:[#allocation2 + $0x28] sm:$0xff]
      %v1515 = vld [vmem:[#allocation2 + $0x30] sm:$0xff]
      %v1516 = vld [vmem:[#allocation2 + $0x38] sm:$0xff]
      %v1517 = vld [vmem:[#allocation2 + $0x40] sm:$0xff]
      %v1518 = vld [vmem:[#allocation2 + $0x48] sm:$0xff]
      %1524 = vrot.lane.b32.xlu0 %v1514, 113
      %v1525 = vpop.permute.xlu0 %1524
      %1526 = vrot.lane.b32.xlu0 %v1515, 113
      %v1527 = vpop.permute.xlu0 %1526
      %1528 = vrot.lane.b32.xlu0 %v1516, 113
      %v1529 = vpop.permute.xlu0 %1528
      %1530 = vrot.lane.b32.xlu0 %v1517, 113
      %v1531 = vpop.permute.xlu0 %1530
      %1532 = vrot.lane.b32.xlu0 %v1518, 113
      %v1533 = vpop.permute.xlu0 %1532
      %v1534 = vsel %vm1433, %v1525, %v1527
      %v1535 = vsel %vm1433, %v1527, %v1529
      %v1536 = vsel %vm1433, %v1529, %v1531
      %v1537 = vsel %vm1433, %v1531, %v1533
      %v1542 = vsel %vm1414, %v1534, 0.0
      %v1543 = vsel %vm1415, %v1535, 0.0
      %v1544 = vsel %vm1416, %v1536, 0.0
      %v1545 = vsel %vm1417, %v1537, 0.0
      %v1546 = vpack.c.bf16 %v1542, %v1542
      %v1547 = vpack.c.bf16 %v1543, %v1543
      %v1548 = vpack.c.bf16 %v1544, %v1544
      %v1549 = vpack.c.bf16 %v1545, %v1545
      %v1554 = vunpack.c.l.b16 %v1546
      %v1555 = vunpack.c.l.b16 %v1547
      %v1556 = vunpack.c.l.b16 %v1548
      %v1557 = vunpack.c.l.b16 %v1549
      %v1558 = vpack.c.b16 %v1555, %v1554
      %v1559 = vpack.c.b16 %v1557, %v1556
      %1562 = vst [vmem:[#allocation3 + $0x180] sm:$0xff] %v1558
      %1563 = vst [vmem:[#allocation3 + $0x188] sm:$0xff] %v1559
      %s1564 = scalar_lea.vmem %s3, 7
      %v1565 = vld [vmem:[%s1564] ss:$8 sm:$0xf]
      %vm1566 = vcmp.ne.f32.partialorder %v1565, 0.0
      %v1567 = vld [vmem:[#allocation2 + $0x8] sm:$0xff]
      %v1568 = vld [vmem:[#allocation2 + $0x10] sm:$0xff]
      %v1569 = vld [vmem:[#allocation2 + $0x18] sm:$0xff]
      %v1570 = vld [vmem:[#allocation2 + $0x20] sm:$0xff]
      %v1571 = vld [vmem:[#allocation2 + $0x28] sm:$0xff]
      %v1572 = vsel %vm1566, 1, 0
      %v1573 = vlaneseq
      %v1574 = vshrl.u32 %v1573, 7
      %v1575 = vsub.s32 0, %v1574
      %v1576 = vrot.slane %v1572, %v1575
      %v1577 = vlaneseq
      %v1578 = vshrl.u32 %v1577, 7
      %v1579 = vsub.s32 1, %v1578
      %v1580 = vrot.slane %v1572, %v1579
      %v1581 = vlaneseq
      %v1582 = vshrl.u32 %v1581, 7
      %v1583 = vsub.s32 2, %v1582
      %v1584 = vrot.slane %v1572, %v1583
      %v1585 = vlaneseq
      %v1586 = vshrl.u32 %v1585, 7
      %v1587 = vsub.s32 3, %v1586
      %v1588 = vrot.slane %v1572, %v1587
      %vm1589 = vcmp.eq.s32.totalorder %v1576, 1
      %vm1590 = vcmp.eq.s32.totalorder %v1580, 1
      %vm1591 = vcmp.eq.s32.totalorder %v1584, 1
      %vm1592 = vcmp.eq.s32.totalorder %v1588, 1
      %1598 = vrot.lane.b32.xlu0 %v1567, 112
      %v1599 = vpop.permute.xlu0 %1598
      %1600 = vrot.lane.b32.xlu0 %v1568, 112
      %v1601 = vpop.permute.xlu0 %1600
      %1602 = vrot.lane.b32.xlu0 %v1569, 112
      %v1603 = vpop.permute.xlu0 %1602
      %1604 = vrot.lane.b32.xlu0 %v1570, 112
      %v1605 = vpop.permute.xlu0 %1604
      %1606 = vrot.lane.b32.xlu0 %v1571, 112
      %v1607 = vpop.permute.xlu0 %1606
      %vm1608 = vcmask 916480
      %v1609 = vsel %vm1608, %v1599, %v1601
      %v1610 = vsel %vm1608, %v1601, %v1603
      %v1611 = vsel %vm1608, %v1603, %v1605
      %v1612 = vsel %vm1608, %v1605, %v1607
      %v1617 = vsel %vm1589, %v1609, 0.0
      %v1618 = vsel %vm1590, %v1610, 0.0
      %v1619 = vsel %vm1591, %v1611, 0.0
      %v1620 = vsel %vm1592, %v1612, 0.0
      %v1621 = vpack.c.bf16 %v1617, %v1617
      %v1622 = vpack.c.bf16 %v1618, %v1618
      %v1623 = vpack.c.bf16 %v1619, %v1619
      %v1624 = vpack.c.bf16 %v1620, %v1620
      %v1629 = vunpack.c.l.b16 %v1621
      %v1630 = vunpack.c.l.b16 %v1622
      %v1631 = vunpack.c.l.b16 %v1623
      %v1632 = vunpack.c.l.b16 %v1624
      %v1633 = vpack.c.b16 %v1630, %v1629
      %v1634 = vpack.c.b16 %v1632, %v1631
      %1637 = vst [vmem:[#allocation3 + $0x70] sm:$0xff] %v1633
      %1638 = vst [vmem:[#allocation3 + $0x78] sm:$0xff] %v1634
      %v1639 = vld [vmem:[#allocation2 + $0x18] sm:$0xff]
      %v1640 = vld [vmem:[#allocation2 + $0x20] sm:$0xff]
      %v1641 = vld [vmem:[#allocation2 + $0x28] sm:$0xff]
      %v1642 = vld [vmem:[#allocation2 + $0x30] sm:$0xff]
      %v1643 = vld [vmem:[#allocation2 + $0x38] sm:$0xff]
      %1649 = vrot.lane.b32.xlu0 %v1639, 112
      %v1650 = vpop.permute.xlu0 %1649
      %1651 = vrot.lane.b32.xlu0 %v1640, 112
      %v1652 = vpop.permute.xlu0 %1651
      %1653 = vrot.lane.b32.xlu0 %v1641, 112
      %v1654 = vpop.permute.xlu0 %1653
      %1655 = vrot.lane.b32.xlu0 %v1642, 112
      %v1656 = vpop.permute.xlu0 %1655
      %1657 = vrot.lane.b32.xlu0 %v1643, 112
      %v1658 = vpop.permute.xlu0 %1657
      %v1659 = vsel %vm1608, %v1650, %v1652
      %v1660 = vsel %vm1608, %v1652, %v1654
      %v1661 = vsel %vm1608, %v1654, %v1656
      %v1662 = vsel %vm1608, %v1656, %v1658
      %v1667 = vsel %vm1589, %v1659, 0.0
      %v1668 = vsel %vm1590, %v1660, 0.0
      %v1669 = vsel %vm1591, %v1661, 0.0
      %v1670 = vsel %vm1592, %v1662, 0.0
      %v1671 = vpack.c.bf16 %v1667, %v1667
      %v1672 = vpack.c.bf16 %v1668, %v1668
      %v1673 = vpack.c.bf16 %v1669, %v1669
      %v1674 = vpack.c.bf16 %v1670, %v1670
      %v1679 = vunpack.c.l.b16 %v1671
      %v1680 = vunpack.c.l.b16 %v1672
      %v1681 = vunpack.c.l.b16 %v1673
      %v1682 = vunpack.c.l.b16 %v1674
      %v1683 = vpack.c.b16 %v1680, %v1679
      %v1684 = vpack.c.b16 %v1682, %v1681
      %1687 = vst [vmem:[#allocation3 + $0x100] sm:$0xff] %v1683
      %1688 = vst [vmem:[#allocation3 + $0x108] sm:$0xff] %v1684
      %v1689 = vld [vmem:[#allocation2 + $0x28] sm:$0xff]
      %v1690 = vld [vmem:[#allocation2 + $0x30] sm:$0xff]
      %v1691 = vld [vmem:[#allocation2 + $0x38] sm:$0xff]
      %v1692 = vld [vmem:[#allocation2 + $0x40] sm:$0xff]
      %v1693 = vld [vmem:[#allocation2 + $0x48] sm:$0xff]
      %1699 = vrot.lane.b32.xlu0 %v1689, 112
      %v1700 = vpop.permute.xlu0 %1699
      %1701 = vrot.lane.b32.xlu0 %v1690, 112
      %v1702 = vpop.permute.xlu0 %1701
      %1703 = vrot.lane.b32.xlu0 %v1691, 112
      %v1704 = vpop.permute.xlu0 %1703
      %1705 = vrot.lane.b32.xlu0 %v1692, 112
      %v1706 = vpop.permute.xlu0 %1705
      %1707 = vrot.lane.b32.xlu0 %v1693, 112
      %v1708 = vpop.permute.xlu0 %1707
      %v1709 = vsel %vm1608, %v1700, %v1702
      %v1710 = vsel %vm1608, %v1702, %v1704
      %v1711 = vsel %vm1608, %v1704, %v1706
      %v1712 = vsel %vm1608, %v1706, %v1708
      %v1717 = vsel %vm1589, %v1709, 0.0
      %v1718 = vsel %vm1590, %v1710, 0.0
      %v1719 = vsel %vm1591, %v1711, 0.0
      %v1720 = vsel %vm1592, %v1712, 0.0
      %v1721 = vpack.c.bf16 %v1717, %v1717
      %v1722 = vpack.c.bf16 %v1718, %v1718
      %v1723 = vpack.c.bf16 %v1719, %v1719
      %v1724 = vpack.c.bf16 %v1720, %v1720
      %v1729 = vunpack.c.l.b16 %v1721
      %v1730 = vunpack.c.l.b16 %v1722
      %v1731 = vunpack.c.l.b16 %v1723
      %v1732 = vunpack.c.l.b16 %v1724
      %v1733 = vpack.c.b16 %v1730, %v1729
      %v1734 = vpack.c.b16 %v1732, %v1731
      %1737 = vst [vmem:[#allocation3 + $0x190] sm:$0xff] %v1733
      %1738 = vst [vmem:[#allocation3 + $0x198] sm:$0xff] %v1734
      %s1739 = scalar_lea.vmem %s3, 32
      %v1740 = vld [vmem:[%s1739] ss:$8 sm:$0xf]
      %vm1741 = vcmp.ne.f32.partialorder %v1740, 0.0
      %v1742 = vld [vmem:[#allocation2 + $0x8] sm:$0xff]
      %v1743 = vld [vmem:[#allocation2 + $0x10] sm:$0xff]
      %v1744 = vld [vmem:[#allocation2 + $0x18] sm:$0xff]
      %v1745 = vld [vmem:[#allocation2 + $0x20] sm:$0xff]
      %v1746 = vld [vmem:[#allocation2 + $0x28] sm:$0xff]
      %v1747 = vsel %vm1741, 1, 0
      %v1748 = vlaneseq
      %v1749 = vshrl.u32 %v1748, 7
      %v1750 = vsub.s32 0, %v1749
      %v1751 = vrot.slane %v1747, %v1750
      %v1752 = vlaneseq
      %v1753 = vshrl.u32 %v1752, 7
      %v1754 = vsub.s32 1, %v1753
      %v1755 = vrot.slane %v1747, %v1754
      %v1756 = vlaneseq
      %v1757 = vshrl.u32 %v1756, 7
      %v1758 = vsub.s32 2, %v1757
      %v1759 = vrot.slane %v1747, %v1758
      %v1760 = vlaneseq
      %v1761 = vshrl.u32 %v1760, 7
      %v1762 = vsub.s32 3, %v1761
      %v1763 = vrot.slane %v1747, %v1762
      %vm1764 = vcmp.eq.s32.totalorder %v1751, 1
      %vm1765 = vcmp.eq.s32.totalorder %v1755, 1
      %vm1766 = vcmp.eq.s32.totalorder %v1759, 1
      %vm1767 = vcmp.eq.s32.totalorder %v1763, 1
      %1773 = vrot.lane.b32.xlu0 %v1742, 111
      %v1774 = vpop.permute.xlu0 %1773
      %1775 = vrot.lane.b32.xlu0 %v1743, 111
      %v1776 = vpop.permute.xlu0 %1775
      %1777 = vrot.lane.b32.xlu0 %v1744, 111
      %v1778 = vpop.permute.xlu0 %1777
      %1779 = vrot.lane.b32.xlu0 %v1745, 111
      %v1780 = vpop.permute.xlu0 %1779
      %1781 = vrot.lane.b32.xlu0 %v1746, 111
      %v1782 = vpop.permute.xlu0 %1781
      %vm1783 = vcmask 908288
      %v1784 = vsel %vm1783, %v1774, %v1776
      %v1785 = vsel %vm1783, %v1776, %v1778
      %v1786 = vsel %vm1783, %v1778, %v1780
      %v1787 = vsel %vm1783, %v1780, %v1782
      %v1792 = vsel %vm1764, %v1784, 0.0
      %v1793 = vsel %vm1765, %v1785, 0.0
      %v1794 = vsel %vm1766, %v1786, 0.0
      %v1795 = vsel %vm1767, %v1787, 0.0
      %v1796 = vpack.c.bf16 %v1792, %v1792
      %v1797 = vpack.c.bf16 %v1793, %v1793
      %v1798 = vpack.c.bf16 %v1794, %v1794
      %v1799 = vpack.c.bf16 %v1795, %v1795
      %v1804 = vunpack.c.l.b16 %v1796
      %v1805 = vunpack.c.l.b16 %v1797
      %v1806 = vunpack.c.l.b16 %v1798
      %v1807 = vunpack.c.l.b16 %v1799
      %v1808 = vpack.c.b16 %v1805, %v1804
      %v1809 = vpack.c.b16 %v1807, %v1806
      %1812 = vst [vmem:[#allocation3 + $0x80] sm:$0xff] %v1808
      %1813 = vst [vmem:[#allocation3 + $0x88] sm:$0xff] %v1809
      %v1814 = vld [vmem:[#allocation2 + $0x18] sm:$0xff]
      %v1815 = vld [vmem:[#allocation2 + $0x20] sm:$0xff]
      %v1816 = vld [vmem:[#allocation2 + $0x28] sm:$0xff]
      %v1817 = vld [vmem:[#allocation2 + $0x30] sm:$0xff]
      %v1818 = vld [vmem:[#allocation2 + $0x38] sm:$0xff]
      %1824 = vrot.lane.b32.xlu0 %v1814, 111
      %v1825 = vpop.permute.xlu0 %1824
      %1826 = vrot.lane.b32.xlu0 %v1815, 111
      %v1827 = vpop.permute.xlu0 %1826
      %1828 = vrot.lane.b32.xlu0 %v1816, 111
      %v1829 = vpop.permute.xlu0 %1828
      %1830 = vrot.lane.b32.xlu0 %v1817, 111
      %v1831 = vpop.permute.xlu0 %1830
      %1832 = vrot.lane.b32.xlu0 %v1818, 111
      %v1833 = vpop.permute.xlu0 %1832
      %v1834 = vsel %vm1783, %v1825, %v1827
      %v1835 = vsel %vm1783, %v1827, %v1829
      %v1836 = vsel %vm1783, %v1829, %v1831
      %v1837 = vsel %vm1783, %v1831, %v1833
      %v1842 = vsel %vm1764, %v1834, 0.0
      %v1843 = vsel %vm1765, %v1835, 0.0
      %v1844 = vsel %vm1766, %v1836, 0.0
      %v1845 = vsel %vm1767, %v1837, 0.0
      %v1846 = vpack.c.bf16 %v1842, %v1842
      %v1847 = vpack.c.bf16 %v1843, %v1843
      %v1848 = vpack.c.bf16 %v1844, %v1844
      %v1849 = vpack.c.bf16 %v1845, %v1845
      %v1854 = vunpack.c.l.b16 %v1846
      %v1855 = vunpack.c.l.b16 %v1847
      %v1856 = vunpack.c.l.b16 %v1848
      %v1857 = vunpack.c.l.b16 %v1849
      %v1858 = vpack.c.b16 %v1855, %v1854
      %v1859 = vpack.c.b16 %v1857, %v1856
      %1862 = vst [vmem:[#allocation3 + $0x110] sm:$0xff] %v1858
      %1863 = vst [vmem:[#allocation3 + $0x118] sm:$0xff] %v1859
      %v1864 = vld [vmem:[#allocation2 + $0x28] sm:$0xff]
      %v1865 = vld [vmem:[#allocation2 + $0x30] sm:$0xff]
      %v1866 = vld [vmem:[#allocation2 + $0x38] sm:$0xff]
      %v1867 = vld [vmem:[#allocation2 + $0x40] sm:$0xff]
      %v1868 = vld [vmem:[#allocation2 + $0x48] sm:$0xff]
      %1874 = vrot.lane.b32.xlu0 %v1864, 111
      %v1875 = vpop.permute.xlu0 %1874
      %1876 = vrot.lane.b32.xlu0 %v1865, 111
      %v1877 = vpop.permute.xlu0 %1876
      %1878 = vrot.lane.b32.xlu0 %v1866, 111
      %v1879 = vpop.permute.xlu0 %1878
      %1880 = vrot.lane.b32.xlu0 %v1867, 111
      %v1881 = vpop.permute.xlu0 %1880
      %1882 = vrot.lane.b32.xlu0 %v1868, 111
      %v1883 = vpop.permute.xlu0 %1882
      %v1884 = vsel %vm1783, %v1875, %v1877
      %v1885 = vsel %vm1783, %v1877, %v1879
      %v1886 = vsel %vm1783, %v1879, %v1881
      %v1887 = vsel %vm1783, %v1881, %v1883
      %v1892 = vsel %vm1764, %v1884, 0.0
      %v1893 = vsel %vm1765, %v1885, 0.0
      %v1894 = vsel %vm1766, %v1886, 0.0
      %v1895 = vsel %vm1767, %v1887, 0.0
      %v1896 = vpack.c.bf16 %v1892, %v1892
      %v1897 = vpack.c.bf16 %v1893, %v1893
      %v1898 = vpack.c.bf16 %v1894, %v1894
      %v1899 = vpack.c.bf16 %v1895, %v1895
      %v1904 = vunpack.c.l.b16 %v1896
      %v1905 = vunpack.c.l.b16 %v1897
      %v1906 = vunpack.c.l.b16 %v1898
      %v1907 = vunpack.c.l.b16 %v1899
      %v1908 = vpack.c.b16 %v1905, %v1904
      %v1909 = vpack.c.b16 %v1907, %v1906
      %1912 = vst [vmem:[#allocation3 + $0x1a0] sm:$0xff] %v1908
      %1913 = vst [vmem:[#allocation3 + $0x1a8] sm:$0xff] %v1909
      %v1914 = vld [vmem:[%s384] sm:$0x3f]
      %v1915 = vld [vmem:[%s384 + $0x8] sm:$0x3f]
      %v1916 = vld [vmem:[%s384 + $0x10] sm:$0x3f]
      %v1917 = vld [vmem:[%s384 + $0x18] sm:$0x3f]
      %v1918 = vpack.c.bf16 %v1914, %v1914
      %v1919 = vpack.c.bf16 %v1915, %v1915
      %v1920 = vpack.c.bf16 %v1916, %v1916
      %v1921 = vpack.c.bf16 %v1917, %v1917
      %v1926 = vunpack.c.l.b16 %v1918
      %v1927 = vunpack.c.l.b16 %v1919
      %v1928 = vunpack.c.l.b16 %v1920
      %v1929 = vunpack.c.l.b16 %v1921
      %v1930 = vpack.c.b16 %v1927, %v1926
      %v1931 = vpack.c.b16 %v1929, %v1928
      %1934 = vst [vmem:[#allocation3 + $0x1b0] sm:$0x77] %v1930
      %1935 = vst [vmem:[#allocation3 + $0x1b8] sm:$0x77] %v1931
      %vm1936 = vcmask 1043459
      %vm1937 = vsmask.f32 3328
      %vm1938 = vmand %vm1936, %vm1937
      %vm1939 = vcmask 1047559
      %vm1940 = vsmask.f32 7424
      %vm1941 = vmand %vm1939, %vm1940
      %vm1942 = vmor %vm1941, %vm1938
      %v1943 = vld [vmem:[#allocation3 + $0x1b0] sm:$0x88]
      %v1944 = vsel %vm1942, 1065369472, %v1943
      %1945 = vst [vmem:[#allocation3 + $0x1b0] sm:$0x88] %v1944
      %v1946 = vld [vmem:[#allocation3 + $0x1b8] sm:$0x88]
      %v1947 = vsel %vm1942, 1065369472, %v1946
      %1948 = vst [vmem:[#allocation3 + $0x1b8] sm:$0x88] %v1947
      %v1949 = vld [vmem:[%s4] sm:$0xff]
      %v1950 = vld [vmem:[%s4 + $0x8] sm:$0xff]
      %v1951 = vld [vmem:[#allocation3] sm:$0xff]
      %v1952 = vld [vmem:[#allocation3 + $0x8] sm:$0xff]
      %v1953 = vld [vmem:[#allocation3 + $0x10] sm:$0xff]
      %v1954 = vld [vmem:[#allocation3 + $0x18] sm:$0xff]
      %v1955 = vld [vmem:[#allocation3 + $0x20] sm:$0xff]
      %v1956 = vld [vmem:[#allocation3 + $0x28] sm:$0xff]
      %v1957 = vld [vmem:[#allocation3 + $0x30] sm:$0xff]
      %v1958 = vld [vmem:[#allocation3 + $0x38] sm:$0xff]
      %v1959 = vld [vmem:[#allocation3 + $0x40] sm:$0xff]
      %v1960 = vld [vmem:[#allocation3 + $0x48] sm:$0xff]
      %v1961 = vld [vmem:[#allocation3 + $0x50] sm:$0xff]
      %v1962 = vld [vmem:[#allocation3 + $0x58] sm:$0xff]
      %v1963 = vld [vmem:[#allocation3 + $0x60] sm:$0xff]
      %v1964 = vld [vmem:[#allocation3 + $0x68] sm:$0xff]
      %v1965 = vld [vmem:[#allocation3 + $0x70] sm:$0xff]
      %v1966 = vld [vmem:[#allocation3 + $0x78] sm:$0xff]
      %v1967 = vld [vmem:[#allocation3 + $0x80] sm:$0xff]
      %v1968 = vld [vmem:[#allocation3 + $0x88] sm:$0xff]
      %v1969 = vld [vmem:[#allocation3 + $0x90] sm:$0xff]
      %v1970 = vld [vmem:[#allocation3 + $0x98] sm:$0xff]
      %v1971 = vld [vmem:[#allocation3 + $0xa0] sm:$0xff]
      %v1972 = vld [vmem:[#allocation3 + $0xa8] sm:$0xff]
      %v1973 = vld [vmem:[#allocation3 + $0xb0] sm:$0xff]
      %v1974 = vld [vmem:[#allocation3 + $0xb8] sm:$0xff]
      %v1975 = vld [vmem:[#allocation3 + $0xc0] sm:$0xff]
      %v1976 = vld [vmem:[#allocation3 + $0xc8] sm:$0xff]
      %v1977 = vld [vmem:[#allocation3 + $0xd0] sm:$0xff]
      %v1978 = vld [vmem:[#allocation3 + $0xd8] sm:$0xff]
      %v1979 = vld [vmem:[#allocation3 + $0xe0] sm:$0xff]
      %v1980 = vld [vmem:[#allocation3 + $0xe8] sm:$0xff]
      %v1981 = vld [vmem:[#allocation3 + $0xf0] sm:$0xff]
      %v1982 = vld [vmem:[#allocation3 + $0xf8] sm:$0xff]
      %v1983 = vld [vmem:[#allocation3 + $0x100] sm:$0xff]
      %v1984 = vld [vmem:[#allocation3 + $0x108] sm:$0xff]
      %v1985 = vld [vmem:[#allocation3 + $0x110] sm:$0xff]
      %v1986 = vld [vmem:[#allocation3 + $0x118] sm:$0xff]
      %v1987 = vld [vmem:[#allocation3 + $0x120] sm:$0xff]
      %v1988 = vld [vmem:[#allocation3 + $0x128] sm:$0xff]
      %v1989 = vld [vmem:[#allocation3 + $0x130] sm:$0xff]
      %v1990 = vld [vmem:[#allocation3 + $0x138] sm:$0xff]
      %v1991 = vld [vmem:[#allocation3 + $0x140] sm:$0xff]
      %v1992 = vld [vmem:[#allocation3 + $0x148] sm:$0xff]
      %v1993 = vld [vmem:[#allocation3 + $0x150] sm:$0xff]
      %v1994 = vld [vmem:[#allocation3 + $0x158] sm:$0xff]
      %v1995 = vld [vmem:[#allocation3 + $0x160] sm:$0xff]
      %v1996 = vld [vmem:[#allocation3 + $0x168] sm:$0xff]
      %v1997 = vld [vmem:[#allocation3 + $0x170] sm:$0xff]
      %v1998 = vld [vmem:[#allocation3 + $0x178] sm:$0xff]
      %v1999 = vld [vmem:[#allocation3 + $0x180] sm:$0xff]
      %v2000 = vld [vmem:[#allocation3 + $0x188] sm:$0xff]
      %v2001 = vld [vmem:[#allocation3 + $0x190] sm:$0xff]
      %v2002 = vld [vmem:[#allocation3 + $0x198] sm:$0xff]
      %v2003 = vld [vmem:[#allocation3 + $0x1a0] sm:$0xff]
      %v2004 = vld [vmem:[#allocation3 + $0x1a8] sm:$0xff]
      %v2005 = vld [vmem:[#allocation3 + $0x1b0] sm:$0xff]
      %v2006 = vld [vmem:[#allocation3 + $0x1b8] sm:$0xff]
      %v2009 = vunpack.c.l.b16 %v1949
      %v2010 = vunpack.c.h.b16 %v1949
      %v2011 = vunpack.c.l.b16 %v1950
      %v2012 = vunpack.c.h.b16 %v1950
      %v2013 = vpack.c.b16 %v2011, %v2009
      %v2014 = vpack.c.b16 %v2012, %v2010
      %v2072 = vunpack.c.l.b16 %v1951
      %v2073 = vunpack.c.h.b16 %v1951
      %v2074 = vunpack.c.l.b16 %v1952
      %v2075 = vunpack.c.h.b16 %v1952
      %v2076 = vunpack.c.l.b16 %v1953
      %v2077 = vunpack.c.h.b16 %v1953
      %v2078 = vunpack.c.l.b16 %v1954
      %v2079 = vunpack.c.h.b16 %v1954
      %v2080 = vunpack.c.l.b16 %v1955
      %v2081 = vunpack.c.h.b16 %v1955
      %v2082 = vunpack.c.l.b16 %v1956
      %v2083 = vunpack.c.h.b16 %v1956
      %v2084 = vunpack.c.l.b16 %v1957
      %v2085 = vunpack.c.h.b16 %v1957
      %v2086 = vunpack.c.l.b16 %v1958
      %v2087 = vunpack.c.h.b16 %v1958
      %v2088 = vunpack.c.l.b16 %v1959
      %v2089 = vunpack.c.h.b16 %v1959
      %v2090 = vunpack.c.l.b16 %v1960
      %v2091 = vunpack.c.h.b16 %v1960
      %v2092 = vunpack.c.l.b16 %v1961
      %v2093 = vunpack.c.h.b16 %v1961
      %v2094 = vunpack.c.l.b16 %v1962
      %v2095 = vunpack.c.h.b16 %v1962
      %v2096 = vunpack.c.l.b16 %v1963
      %v2097 = vunpack.c.h.b16 %v1963
      %v2098 = vunpack.c.l.b16 %v1964
      %v2099 = vunpack.c.h.b16 %v1964
      %v2100 = vunpack.c.l.b16 %v1965
      %v2101 = vunpack.c.h.b16 %v1965
      %v2102 = vunpack.c.l.b16 %v1966
      %v2103 = vunpack.c.h.b16 %v1966
      %v2104 = vunpack.c.l.b16 %v1967
      %v2105 = vunpack.c.h.b16 %v1967
      %v2106 = vunpack.c.l.b16 %v1968
      %v2107 = vunpack.c.h.b16 %v1968
      %v2108 = vunpack.c.l.b16 %v1969
      %v2109 = vunpack.c.h.b16 %v1969
      %v2110 = vunpack.c.l.b16 %v1970
      %v2111 = vunpack.c.h.b16 %v1970
      %v2112 = vunpack.c.l.b16 %v1971
      %v2113 = vunpack.c.h.b16 %v1971
      %v2114 = vunpack.c.l.b16 %v1972
      %v2115 = vunpack.c.h.b16 %v1972
      %v2116 = vunpack.c.l.b16 %v1973
      %v2117 = vunpack.c.h.b16 %v1973
      %v2118 = vunpack.c.l.b16 %v1974
      %v2119 = vunpack.c.h.b16 %v1974
      %v2120 = vunpack.c.l.b16 %v1975
      %v2121 = vunpack.c.h.b16 %v1975
      %v2122 = vunpack.c.l.b16 %v1976
      %v2123 = vunpack.c.h.b16 %v1976
      %v2124 = vunpack.c.l.b16 %v1977
      %v2125 = vunpack.c.h.b16 %v1977
      %v2126 = vunpack.c.l.b16 %v1978
      %v2127 = vunpack.c.h.b16 %v1978
      %v2128 = vunpack.c.l.b16 %v1979
      %v2129 = vunpack.c.h.b16 %v1979
      %v2130 = vunpack.c.l.b16 %v1980
      %v2131 = vunpack.c.h.b16 %v1980
      %v2132 = vunpack.c.l.b16 %v1981
      %v2133 = vunpack.c.h.b16 %v1981
      %v2134 = vunpack.c.l.b16 %v1982
      %v2135 = vunpack.c.h.b16 %v1982
      %v2136 = vunpack.c.l.b16 %v1983
      %v2137 = vunpack.c.h.b16 %v1983
      %v2138 = vunpack.c.l.b16 %v1984
      %v2139 = vunpack.c.h.b16 %v1984
      %v2140 = vunpack.c.l.b16 %v1985
      %v2141 = vunpack.c.h.b16 %v1985
      %v2142 = vunpack.c.l.b16 %v1986
      %v2143 = vunpack.c.h.b16 %v1986
      %v2144 = vunpack.c.l.b16 %v1987
      %v2145 = vunpack.c.h.b16 %v1987
      %v2146 = vunpack.c.l.b16 %v1988
      %v2147 = vunpack.c.h.b16 %v1988
      %v2148 = vunpack.c.l.b16 %v1989
      %v2149 = vunpack.c.h.b16 %v1989
      %v2150 = vunpack.c.l.b16 %v1990
      %v2151 = vunpack.c.h.b16 %v1990
      %v2152 = vunpack.c.l.b16 %v1991
      %v2153 = vunpack.c.h.b16 %v1991
      %v2154 = vunpack.c.l.b16 %v1992
      %v2155 = vunpack.c.h.b16 %v1992
      %v2156 = vunpack.c.l.b16 %v1993
      %v2157 = vunpack.c.h.b16 %v1993
      %v2158 = vunpack.c.l.b16 %v1994
      %v2159 = vunpack.c.h.b16 %v1994
      %v2160 = vunpack.c.l.b16 %v1995
      %v2161 = vunpack.c.h.b16 %v1995
      %v2162 = vunpack.c.l.b16 %v1996
      %v2163 = vunpack.c.h.b16 %v1996
      %v2164 = vunpack.c.l.b16 %v1997
      %v2165 = vunpack.c.h.b16 %v1997
      %v2166 = vunpack.c.l.b16 %v1998
      %v2167 = vunpack.c.h.b16 %v1998
      %v2168 = vunpack.c.l.b16 %v1999
      %v2169 = vunpack.c.h.b16 %v1999
      %v2170 = vunpack.c.l.b16 %v2000
      %v2171 = vunpack.c.h.b16 %v2000
      %v2172 = vunpack.c.l.b16 %v2001
      %v2173 = vunpack.c.h.b16 %v2001
      %v2174 = vunpack.c.l.b16 %v2002
      %v2175 = vunpack.c.h.b16 %v2002
      %v2176 = vunpack.c.l.b16 %v2003
      %v2177 = vunpack.c.h.b16 %v2003
      %v2178 = vunpack.c.l.b16 %v2004
      %v2179 = vunpack.c.h.b16 %v2004
      %v2180 = vunpack.c.l.b16 %v2005
      %v2181 = vunpack.c.h.b16 %v2005
      %v2182 = vunpack.c.l.b16 %v2006
      %v2183 = vunpack.c.h.b16 %v2006
      %v2184 = vpack.c.b16 %v2076, %v2072
      %v2185 = vpack.c.b16 %v2077, %v2073
      %v2186 = vpack.c.b16 %v2078, %v2074
      %v2187 = vpack.c.b16 %v2079, %v2075
      %v2188 = vpack.c.b16 %v2084, %v2080
      %v2189 = vpack.c.b16 %v2085, %v2081
      %v2190 = vpack.c.b16 %v2086, %v2082
      %v2191 = vpack.c.b16 %v2087, %v2083
      %v2192 = vpack.c.b16 %v2092, %v2088
      %v2193 = vpack.c.b16 %v2093, %v2089
      %v2194 = vpack.c.b16 %v2094, %v2090
      %v2195 = vpack.c.b16 %v2095, %v2091
      %v2196 = vpack.c.b16 %v2100, %v2096
      %v2197 = vpack.c.b16 %v2101, %v2097
      %v2198 = vpack.c.b16 %v2102, %v2098
      %v2199 = vpack.c.b16 %v2103, %v2099
      %v2200 = vpack.c.b16 %v2108, %v2104
      %v2201 = vpack.c.b16 %v2109, %v2105
      %v2202 = vpack.c.b16 %v2110, %v2106
      %v2203 = vpack.c.b16 %v2111, %v2107
      %v2204 = vpack.c.b16 %v2116, %v2112
      %v2205 = vpack.c.b16 %v2117, %v2113
      %v2206 = vpack.c.b16 %v2118, %v2114
      %v2207 = vpack.c.b16 %v2119, %v2115
      %v2208 = vpack.c.b16 %v2124, %v2120
      %v2209 = vpack.c.b16 %v2125, %v2121
      %v2210 = vpack.c.b16 %v2126, %v2122
      %v2211 = vpack.c.b16 %v2127, %v2123
      %v2212 = vpack.c.b16 %v2132, %v2128
      %v2213 = vpack.c.b16 %v2133, %v2129
      %v2214 = vpack.c.b16 %v2134, %v2130
      %v2215 = vpack.c.b16 %v2135, %v2131
      %v2216 = vpack.c.b16 %v2140, %v2136
      %v2217 = vpack.c.b16 %v2141, %v2137
      %v2218 = vpack.c.b16 %v2142, %v2138
      %v2219 = vpack.c.b16 %v2143, %v2139
      %v2220 = vpack.c.b16 %v2148, %v2144
      %v2221 = vpack.c.b16 %v2149, %v2145
      %v2222 = vpack.c.b16 %v2150, %v2146
      %v2223 = vpack.c.b16 %v2151, %v2147
      %v2224 = vpack.c.b16 %v2156, %v2152
      %v2225 = vpack.c.b16 %v2157, %v2153
      %v2226 = vpack.c.b16 %v2158, %v2154
      %v2227 = vpack.c.b16 %v2159, %v2155
      %v2228 = vpack.c.b16 %v2164, %v2160
      %v2229 = vpack.c.b16 %v2165, %v2161
      %v2230 = vpack.c.b16 %v2166, %v2162
      %v2231 = vpack.c.b16 %v2167, %v2163
      %v2232 = vpack.c.b16 %v2172, %v2168
      %v2233 = vpack.c.b16 %v2173, %v2169
      %v2234 = vpack.c.b16 %v2174, %v2170
      %v2235 = vpack.c.b16 %v2175, %v2171
      %v2236 = vpack.c.b16 %v2180, %v2176
      %v2237 = vpack.c.b16 %v2181, %v2177
      %v2238 = vpack.c.b16 %v2182, %v2178
      %v2239 = vpack.c.b16 %v2183, %v2179
      %vm2292 = vcmask 777216
      %v2294 = vsel %vm2292, %v2014, 0
      %vm2296 = vcmask 1046528
      %vm2297 = vcmask 1047552
      %v2298 = vsel %vm2296, 4294967295, 65535
      %v2299 = vsel %vm2297, %v2298, 0
      %v2301 = vand.u32 %v2236, %v2299
      %v2304 = vand.u32 %v2237, %v2299
      %v2307 = vand.u32 %v2238, %v2299
      %v2310 = vand.u32 %v2239, %v2299
      %2312 = vmatprep.subr.bf16.mxu0 %v2213
      %2313 = vmatpush1.bf16.msra.mxu0 %v2212
      %2314 = vmatprep.subr.bf16.mxu0 %v2209
      %2315 = vmatpush1.bf16.msra.mxu0 %v2208
      %2316 = vmatprep.subr.bf16.mxu0 %v2205
      %2317 = vmatpush1.bf16.msra.mxu0 %v2204
      %2318 = vmatprep.subr.bf16.mxu0 %v2201
      %2319 = vmatpush1.bf16.msra.mxu0 %v2200
      %2320 = vmatprep.subr.bf16.mxu0 %v2197
      %2321 = vmatpush1.bf16.msra.mxu0 %v2196
      %2322 = vmatprep.subr.bf16.mxu0 %v2193
      %2323 = vmatpush1.bf16.msra.mxu0 %v2192
      %2324 = vmatprep.subr.bf16.mxu0 %v2189
      %2325 = vmatpush1.bf16.msra.mxu0 %v2188
      %2326 = vmatprep.subr.bf16.mxu0 %v2185
      %2327 = vmatpush1.bf16.msra.mxu0 %v2184
      %2328 = vmatprep.subr.bf16.mxu0 0
      %2329 = vmatpush2.bf16.msra.mxu0 0
      %2330 = vmatprep.subr.bf16.mxu0 0
      %2331 = vmatpush2.bf16.msra.mxu0 0
      %2332 = vmatprep.subr.bf16.mxu0 %v2304
      %2333 = vmatpush2.bf16.msra.mxu0 %v2301
      %2334 = vmatprep.subr.bf16.mxu0 %v2233
      %2335 = vmatpush2.bf16.msra.mxu0 %v2232
      %2336 = vmatprep.subr.bf16.mxu0 %v2229
      %2337 = vmatpush2.bf16.msra.mxu0 %v2228
      %2338 = vmatprep.subr.bf16.mxu0 %v2225
      %2339 = vmatpush2.bf16.msra.mxu0 %v2224
      %2340 = vmatprep.subr.bf16.mxu0 %v2221
      %2341 = vmatpush2.bf16.msra.mxu0 %v2220
      %2342 = vmatprep.subr.bf16.mxu0 %v2217
      %2343 = vmatpush2.bf16.msra.mxu0 %v2216
      %2344 = vmatprep.mubr.bf16.mxu0 %v2294
      %2345 = vmatmul.mubr.bf16.gmra.mxu0 %v2013
      %v2346 = vpop.f32.mrf.mxu0
      %v2347 = vadd.f32 0.0, %v2346
      %v2348 = vpop.f32.mrf.mxu0
      %v2349 = vadd.f32 0.0, %v2348
      %v2350 = vpop.f32.mrf.mxu0
      %v2351 = vadd.f32 0.0, %v2350
      %v2352 = vpop.f32.mrf.mxu0
      %v2353 = vadd.f32 0.0, %v2352
      %2354 = vdwg.mxu0
      %2355 = vmatprep.subr.bf16.mxu0 %v2215
      %2356 = vmatpush1.bf16.msra.mxu0 %v2214
      %2357 = vmatprep.subr.bf16.mxu0 %v2211
      %2358 = vmatpush1.bf16.msra.mxu0 %v2210
      %2359 = vmatprep.subr.bf16.mxu0 %v2207
      %2360 = vmatpush1.bf16.msra.mxu0 %v2206
      %2361 = vmatprep.subr.bf16.mxu0 %v2203
      %2362 = vmatpush1.bf16.msra.mxu0 %v2202
      %2363 = vmatprep.subr.bf16.mxu0 %v2199
      %2364 = vmatpush1.bf16.msra.mxu0 %v2198
      %2365 = vmatprep.subr.bf16.mxu0 %v2195
      %2366 = vmatpush1.bf16.msra.mxu0 %v2194
      %2367 = vmatprep.subr.bf16.mxu0 %v2191
      %2368 = vmatpush1.bf16.msra.mxu0 %v2190
      %2369 = vmatprep.subr.bf16.mxu0 %v2187
      %2370 = vmatpush1.bf16.msra.mxu0 %v2186
      %2371 = vmatprep.subr.bf16.mxu0 0
      %2372 = vmatpush2.bf16.msra.mxu0 0
      %2373 = vmatprep.subr.bf16.mxu0 0
      %2374 = vmatpush2.bf16.msra.mxu0 0
      %2375 = vmatprep.subr.bf16.mxu0 %v2310
      %2376 = vmatpush2.bf16.msra.mxu0 %v2307
      %2377 = vmatprep.subr.bf16.mxu0 %v2235
      %2378 = vmatpush2.bf16.msra.mxu0 %v2234
      %2379 = vmatprep.subr.bf16.mxu0 %v2231
      %2380 = vmatpush2.bf16.msra.mxu0 %v2230
      %2381 = vmatprep.subr.bf16.mxu0 %v2227
      %2382 = vmatpush2.bf16.msra.mxu0 %v2226
      %2383 = vmatprep.subr.bf16.mxu0 %v2223
      %2384 = vmatpush2.bf16.msra.mxu0 %v2222
      %2385 = vmatprep.subr.bf16.mxu0 %v2219
      %2386 = vmatpush2.bf16.msra.mxu0 %v2218
      %2387 = vmatprep.mubr.bf16.mxu0 %v2294
      %2388 = vmatmul.mubr.bf16.gmra.mxu0 %v2013
      %v2389 = vpop.f32.mrf.mxu0
      %v2390 = vadd.f32 0.0, %v2389
      %v2391 = vpop.f32.mrf.mxu0
      %v2392 = vadd.f32 0.0, %v2391
      %v2393 = vpop.f32.mrf.mxu0
      %v2394 = vadd.f32 0.0, %v2393
      %v2395 = vpop.f32.mrf.mxu0
      %v2396 = vadd.f32 0.0, %v2395
      %2397 = vdwg.mxu0
      %v2398 = vxor.u32 %v2347, 2147483648
      %v2399 = vxor.u32 %v2349, 2147483648
      %v2400 = vxor.u32 %v2390, 2147483648
      %v2401 = vxor.u32 %v2392, 2147483648
      %v2402 = vmul.f32 %v2398, 1.442695
      %v2403 = vpow.pop %v2402
      %v2404 = vmul.f32 %v2399, 1.442695
      %v2405 = vpow.pop %v2404
      %v2406 = vmul.f32 %v2400, 1.442695
      %v2407 = vpow.pop %v2406
      %v2408 = vmul.f32 %v2401, 1.442695
      %v2409 = vpow.pop %v2408
      %v2410 = vadd.f32 %v2403, 1.0
      %v2411 = vadd.f32 %v2405, 1.0
      %v2412 = vadd.f32 %v2407, 1.0
      %v2413 = vadd.f32 %v2409, 1.0
      %v2414 = vrcp.pop %v2410
      %v2415 = vmul.f32 1.0, %v2414
      %v2416 = vrcp.pop %v2411
      %v2417 = vmul.f32 1.0, %v2416
      %v2418 = vrcp.pop %v2412
      %v2419 = vmul.f32 1.0, %v2418
      %v2420 = vrcp.pop %v2413
      %v2421 = vmul.f32 1.0, %v2420
      %v2422 = vtanh.pop %v2351
      %v2423 = vtanh.pop %v2353
      %v2424 = vtanh.pop %v2394
      %v2425 = vtanh.pop %v2396
      %v2426 = vmul.f32 %v2415, %v2422
      %v2427 = vmul.f32 %v2417, %v2423
      %v2428 = vmul.f32 %v2419, %v2424
      %v2429 = vmul.f32 %v2421, %v2425
      %v2430 = vld [vmem:[%s5] sm:$0xff]
      %v2431 = vld [vmem:[%s5 + $0x8] sm:$0xff]
      %v2432 = vld [vmem:[%s6] sm:$0xff]
      %v2433 = vld [vmem:[%s6 + $0x8] sm:$0xff]
      %2435 = vset.pattern.permute.xlu0 0
      %2436 = vperm.xlu0 %2435, %v2432
      %v2437 = vpop.permute.xlu0 %2436
      %2440 = vset.pattern.permute.xlu0 0
      %2441 = vperm.xlu0 %2440, %v2433
      %v2442 = vpop.permute.xlu0 %2441
      %vm2444 = vcmask 64512
      %v2446 = vsel %vm2444, %v2430, 0
      %v2449 = vsel %vm2444, %v2431, 0
      %2451 = vmatprep.subr.mxu0 0.0
      %2452 = vmatpush1.msra.mxu0 0.0
      %2453 = vmatprep.subr.mxu0 0.0
      %2454 = vmatpush1.msra.mxu0 0.0
      %2455 = vmatprep.subr.mxu0 0.0
      %2456 = vmatpush1.msra.mxu0 0.0
      %2457 = vmatprep.subr.mxu0 0.0
      %2458 = vmatpush1.msra.mxu0 0.0
      %2459 = vmatprep.subr.mxu0 0.0
      %2460 = vmatpush1.msra.mxu0 0.0
      %2461 = vmatprep.subr.mxu0 0.0
      %2462 = vmatpush1.msra.mxu0 0.0
      %2463 = vmatprep.subr.mxu0 0.0
      %2464 = vmatpush1.msra.mxu0 0.0
      %2465 = vmatprep.subr.mxu0 0.0
      %2466 = vmatpush1.msra.mxu0 0.0
      %2467 = vmatprep.subr.mxu0 0.0
      %2468 = vmatpush1.msra.mxu0 0.0
      %2469 = vmatprep.subr.mxu0 0.0
      %2470 = vmatpush1.msra.mxu0 0.0
      %2471 = vmatprep.subr.mxu0 0.0
      %2472 = vmatpush1.msra.mxu0 0.0
      %2473 = vmatprep.subr.mxu0 0.0
      %2474 = vmatpush1.msra.mxu0 0.0
      %2475 = vmatprep.subr.mxu0 0.0
      %2476 = vmatpush1.msra.mxu0 0.0
      %2477 = vmatprep.subr.mxu0 0.0
      %2478 = vmatpush1.msra.mxu0 0.0
      %2479 = vmatprep.subr.mxu0 0.0
      %2480 = vmatpush1.msra.mxu0 0.0
      %2481 = vmatprep.subr.mxu0 %v2427
      %2482 = vmatpush1.msra.mxu0 %v2426
      %2483 = vmatprep.subr.mxu0 0.0
      %2484 = vmatpush2.msra.mxu0 0.0
      %2485 = vmatprep.subr.mxu0 0.0
      %2486 = vmatpush2.msra.mxu0 0.0
      %2487 = vmatprep.subr.mxu0 0.0
      %2488 = vmatpush2.msra.mxu0 0.0
      %2489 = vmatprep.subr.mxu0 0.0
      %2490 = vmatpush2.msra.mxu0 0.0
      %2491 = vmatprep.subr.mxu0 0.0
      %2492 = vmatpush2.msra.mxu0 0.0
      %2493 = vmatprep.subr.mxu0 0.0
      %2494 = vmatpush2.msra.mxu0 0.0
      %2495 = vmatprep.subr.mxu0 0.0
      %2496 = vmatpush2.msra.mxu0 0.0
      %2497 = vmatprep.subr.mxu0 0.0
      %2498 = vmatpush2.msra.mxu0 0.0
      %2499 = vmatprep.subr.mxu0 0.0
      %2500 = vmatpush2.msra.mxu0 0.0
      %2501 = vmatprep.subr.mxu0 0.0
      %2502 = vmatpush2.msra.mxu0 0.0
      %2503 = vmatprep.subr.mxu0 0.0
      %2504 = vmatpush2.msra.mxu0 0.0
      %2505 = vmatprep.subr.mxu0 0.0
      %2506 = vmatpush2.msra.mxu0 0.0
      %2507 = vmatprep.subr.mxu0 0.0
      %2508 = vmatpush2.msra.mxu0 0.0
      %2509 = vmatprep.subr.mxu0 0.0
      %2510 = vmatpush2.msra.mxu0 0.0
      %2511 = vmatprep.subr.mxu0 0.0
      %2512 = vmatpush2.msra.mxu0 0.0
      %2513 = vmatprep.subr.mxu0 0.0
      %2514 = vmatpush2.msra.mxu0 0.0
      %2515 = vmatprep.mubr.f32.mxu0 0.0
      %2516 = vmatmul.mubr.f32.gmra.mxu0 %v2446
      %v2517 = vpop.f32.mrf.mxu0
      %v2518 = vadd.f32 %v2437, %v2517
      %v2519 = vpop.f32.mrf.mxu0
      %v2520 = vadd.f32 %v2437, %v2519
      %2521 = vmatprep.mubr.f32.mxu0 0.0
      %2522 = vmatmul.mubr.f32.gmra.mxu0 %v2449
      %v2523 = vpop.f32.mrf.mxu0
      %v2524 = vadd.f32 %v2442, %v2523
      %v2525 = vpop.f32.mrf.mxu0
      %v2526 = vadd.f32 %v2442, %v2525
      %2527 = vdwg.mxu0
      %2528 = vmatprep.subr.mxu0 0.0
      %2529 = vmatpush1.msra.mxu0 0.0
      %2530 = vmatprep.subr.mxu0 0.0
      %2531 = vmatpush1.msra.mxu0 0.0
      %2532 = vmatprep.subr.mxu0 0.0
      %2533 = vmatpush1.msra.mxu0 0.0
      %2534 = vmatprep.subr.mxu0 0.0
      %2535 = vmatpush1.msra.mxu0 0.0
      %2536 = vmatprep.subr.mxu0 0.0
      %2537 = vmatpush1.msra.mxu0 0.0
      %2538 = vmatprep.subr.mxu0 0.0
      %2539 = vmatpush1.msra.mxu0 0.0
      %2540 = vmatprep.subr.mxu0 0.0
      %2541 = vmatpush1.msra.mxu0 0.0
      %2542 = vmatprep.subr.mxu0 0.0
      %2543 = vmatpush1.msra.mxu0 0.0
      %2544 = vmatprep.subr.mxu0 0.0
      %2545 = vmatpush1.msra.mxu0 0.0
      %2546 = vmatprep.subr.mxu0 0.0
      %2547 = vmatpush1.msra.mxu0 0.0
      %2548 = vmatprep.subr.mxu0 0.0
      %2549 = vmatpush1.msra.mxu0 0.0
      %2550 = vmatprep.subr.mxu0 0.0
      %2551 = vmatpush1.msra.mxu0 0.0
      %2552 = vmatprep.subr.mxu0 0.0
      %2553 = vmatpush1.msra.mxu0 0.0
      %2554 = vmatprep.subr.mxu0 0.0
      %2555 = vmatpush1.msra.mxu0 0.0
      %2556 = vmatprep.subr.mxu0 0.0
      %2557 = vmatpush1.msra.mxu0 0.0
      %2558 = vmatprep.subr.mxu0 %v2429
      %2559 = vmatpush1.msra.mxu0 %v2428
      %2560 = vmatprep.subr.mxu0 0.0
      %2561 = vmatpush2.msra.mxu0 0.0
      %2562 = vmatprep.subr.mxu0 0.0
      %2563 = vmatpush2.msra.mxu0 0.0
      %2564 = vmatprep.subr.mxu0 0.0
      %2565 = vmatpush2.msra.mxu0 0.0
      %2566 = vmatprep.subr.mxu0 0.0
      %2567 = vmatpush2.msra.mxu0 0.0
      %2568 = vmatprep.subr.mxu0 0.0
      %2569 = vmatpush2.msra.mxu0 0.0
      %2570 = vmatprep.subr.mxu0 0.0
      %2571 = vmatpush2.msra.mxu0 0.0
      %2572 = vmatprep.subr.mxu0 0.0
      %2573 = vmatpush2.msra.mxu0 0.0
      %2574 = vmatprep.subr.mxu0 0.0
      %2575 = vmatpush2.msra.mxu0 0.0
      %2576 = vmatprep.subr.mxu0 0.0
      %2577 = vmatpush2.msra.mxu0 0.0
      %2578 = vmatprep.subr.mxu0 0.0
      %2579 = vmatpush2.msra.mxu0 0.0
      %2580 = vmatprep.subr.mxu0 0.0
      %2581 = vmatpush2.msra.mxu0 0.0
      %2582 = vmatprep.subr.mxu0 0.0
      %2583 = vmatpush2.msra.mxu0 0.0
      %2584 = vmatprep.subr.mxu0 0.0
      %2585 = vmatpush2.msra.mxu0 0.0
      %2586 = vmatprep.subr.mxu0 0.0
      %2587 = vmatpush2.msra.mxu0 0.0
      %2588 = vmatprep.subr.mxu0 0.0
      %2589 = vmatpush2.msra.mxu0 0.0
      %2590 = vmatprep.subr.mxu0 0.0
      %2591 = vmatpush2.msra.mxu0 0.0
      %2592 = vmatprep.mubr.f32.mxu0 0.0
      %2593 = vmatmul.mubr.f32.gmra.mxu0 %v2446
      %v2594 = vpop.f32.mrf.mxu0
      %v2595 = vadd.f32 %v2437, %v2594
      %v2596 = vpop.f32.mrf.mxu0
      %v2597 = vadd.f32 %v2437, %v2596
      %2598 = vmatprep.mubr.f32.mxu0 0.0
      %2599 = vmatmul.mubr.f32.gmra.mxu0 %v2449
      %v2600 = vpop.f32.mrf.mxu0
      %v2601 = vadd.f32 %v2442, %v2600
      %v2602 = vpop.f32.mrf.mxu0
      %v2603 = vadd.f32 %v2442, %v2602
      %2604 = vdwg.mxu0
      %v2605 = vld [vmem:[#allocation2 + $0x18] sm:$0xff]
      %v2606 = vld [vmem:[#allocation2 + $0x20] sm:$0xff]
      %v2607 = vld [vmem:[#allocation2 + $0x28] sm:$0xff]
      %v2608 = vld [vmem:[#allocation2 + $0x30] sm:$0xff]
      %v2609 = vsub.f32 %v2605, %v427
      %v2610 = vsub.f32 %v2606, %v427
      %v2611 = vsub.f32 %v2607, %v427
      %v2612 = vsub.f32 %v2608, %v427
      %v2613 = vadd.f32 %v2609, %v2518
      %v2614 = vadd.f32 %v2610, %v2520
      %v2615 = vadd.f32 %v2611, %v2595
      %v2616 = vadd.f32 %v2612, %v2597
      %v2617 = vmul.f32 %v2613, 0.70710677
      %v2618 = vmul.f32 %v2614, 0.70710677
      %v2619 = vmul.f32 %v2615, 0.70710677
      %v2620 = vmul.f32 %v2616, 0.70710677
      %2621 = vst [vmem:[%s394] sm:$0xff] %v2617
      %2622 = vst [vmem:[%s394 + $0x8] sm:$0xff] %v2618
      %2623 = vst [vmem:[%s394 + $0x10] sm:$0xff] %v2619
      %2624 = vst [vmem:[%s394 + $0x18] sm:$0xff] %v2620
      %2625 = vst [vmem:[%s404] sm:$0xff] %v2524
      %2626 = vst [vmem:[%s404 + $0x8] sm:$0xff] %v2526
      %2627 = vst [vmem:[%s404 + $0x10] sm:$0xff] %v2601
      %2628 = vst [vmem:[%s404 + $0x18] sm:$0xff] %v2603
      %s2629 = smul.u32 4, %s25
      %p2630 = scmp.lt.s32.totalorder %s24, 1
      %s2631 = scalar_select %p2630, %s24, 1
      %p2632 = scmp.lt.s32.totalorder %s2629, 7
      %s2633 = scalar_select %p2632, %s2629, 7
      %s2634 = smul.addr %s2631, 8
      %s2635 = sadd.s32 %s2633, %s2634
      %s2636 = smul.addr %s2635, 8
      %s2637 = scalar_lea.vmem %s7, %s2636
      %s2638 = smul.u32 4, %s25
      %p2639 = scmp.lt.s32.totalorder %s24, 1
      %s2640 = scalar_select %p2639, %s24, 1
      %p2641 = scmp.lt.s32.totalorder %s2638, 7
      %s2642 = scalar_select %p2641, %s2638, 7
      %s2643 = smul.addr %s2640, 8
      %s2644 = sadd.s32 %s2642, %s2643
      %s2645 = smul.addr %s2644, 8
      %s2646 = scalar_lea.vmem %s8, %s2645
      // Predicated region
      $region49: #{diffwave3d_block.1} parent=47 // pred_check
        %p2647 = pneg %p216
      $region50: #{diffwave3d_block.1} parent=47 // pred_check_branch
        %2649 = sbr.rel (%p2647) target = $region52
      $region51: #{diffwave3d_block.1} parent=47 // pred_region
        %s2650 = smul.u32 4, %s25
      $region52: #{diffwave3d_block.1} parent=47 // pred_fallthru
        _
      // Predicated region
      $region53: #{diffwave3d_block.1} parent=47 // pred_check
        %p2651 = pneg %p244
      $region54: #{diffwave3d_block.1} parent=47 // pred_check_branch
        %2653 = sbr.rel (%p2651) target = $region56
      $region55: #{diffwave3d_block.1} parent=47 // pred_region
        %s2654 = smul.u32 4, %s25
      $region56: #{diffwave3d_block.1} parent=47 // pred_fallthru
        _
    $region48: #{diffwave3d_block.1} parent=5 // pred_fallthru
      _
    %p2655 = scmp.le.s32.totalorder 2, %s15
    // Predicated region
    $region57: #{diffwave3d_block.1} parent=5 // pred_check
      %p2656 = pneg %p2655
    $region58: #{diffwave3d_block.1} parent=5 // pred_check_branch
      %2658 = sbr.rel (%p2656) target = $region60
    $region59: #{diffwave3d_block.1} parent=5 // pred_region
      %s2659 = ssub.s32 %s15, 2
      // Predicated region
      $region61: #{diffwave3d_block.1} parent=59 // pred_check
        %p2660 = pneg %p222
      $region62: #{diffwave3d_block.1} parent=59 // pred_check_branch
        %2662 = sbr.rel (%p2660) target = $region64
      $region63: #{diffwave3d_block.1} parent=59 // pred_region
        %s2663 = smul.u32 4, %s27
        %p2664 = scmp.lt.s32.totalorder %s26, 1
        %s2665 = scalar_select %p2664, %s26, 1
        %p2666 = scmp.lt.s32.totalorder %s2663, 7
        %s2667 = scalar_select %p2666, %s2663, 7
        %s2668 = smul.addr %s2665, 8
        %s2669 = sadd.s32 %s2667, %s2668
        %s2670 = smul.addr %s2669, 8
        %s2671 = scalar_lea.vmem %s7, %s2670
      $region64: #{diffwave3d_block.1} parent=59 // pred_fallthru
        _
      // Predicated region
      $region65: #{diffwave3d_block.1} parent=59 // pred_check
        %p2672 = pneg %p250
      $region66: #{diffwave3d_block.1} parent=59 // pred_check_branch
        %2674 = sbr.rel (%p2672) target = $region68
      $region67: #{diffwave3d_block.1} parent=59 // pred_region
        %s2675 = smul.u32 4, %s27
        %p2676 = scmp.lt.s32.totalorder %s26, 1
        %s2677 = scalar_select %p2676, %s26, 1
        %p2678 = scmp.lt.s32.totalorder %s2675, 7
        %s2679 = scalar_select %p2678, %s2675, 7
        %s2680 = smul.addr %s2677, 8
        %s2681 = sadd.s32 %s2679, %s2680
        %s2682 = smul.addr %s2681, 8
        %s2683 = scalar_lea.vmem %s8, %s2682
      $region68: #{diffwave3d_block.1} parent=59 // pred_fallthru
        _
    $region60: #{diffwave3d_block.1} parent=5 // pred_fallthru
      _
  $region6: #{diffwave3d_block.1} parent=0 // loop_footer
    %s19 = sadd.s32 1, %s15
  $region7: #{diffwave3d_block.1} parent=0 // loop_footer_branch
    %14 = sbr.rel target = $region3
  $region8: #{diffwave3d_block.1} parent=0 // loop_exit
    _

</llo_original>
